<compile_context>
chip_gen: v7x
topology: tpu7x:2x2x1
jax: 0.10.0
libtpu: 0.0.40
codegen_flags: <defaults>
</compile_context>

<pallas_src>
import functools

import jax
import jax.numpy as jnp
import numpy as np
from jax.experimental import pallas as pl
from jax.experimental.pallas import tpu as pltpu


def _round_up(x, m):
  return (x + m - 1) // m * m


def _dbstem_layer_kernel(
    x_ref,        # (S*TB, 2D)   rows time-major: [x_t | x_{S-1-t}] (bwd pre-reversed)
    init_ref,     # (2, 2H)      row0 = [h0_f | h0_b] (raw, tanh here), row1 = [c0_f | c0_b]
    wih_ref,      # (2D, 8H)     block-diag input proj, gate cols [i_f i_b f_f f_b o_f o_b g_f g_b]
    bias_ref,     # (1, 8H)      bih+bhh, same gate-column permutation
    whh_ref,      # (2H, 8H)     block-diag recurrent weights, same gate columns
    whead_f_ref,  # (H, 128)     fwd half of fused [w_ori | w_jnt | 0-pad] head
    whead_b_ref,  # (H, 128)     bwd half
    bhead_ref,    # (1, 128)
    out_ref,      # (S*TB, 128)  logits slab: cols [0:OB]=right/direc, [OB]=jnt_lhs
    xp_ref,       # scratch (S*TB, 8H)  hoisted input projection (both directions)
    hidf_ref,     # scratch (S*TB, H)   forward hidden states
    hidb_ref,     # scratch (S*TB, H)   backward hidden states
    *, seq_len, batch_tile, hidden):
  S, TB, H = seq_len, batch_tile, hidden

  # ---- 1) hoisted input projection: one big MXU matmul for all t, both dirs ----
  x = x_ref[...].astype(jnp.float32)                                  # (S*TB, 2D)
  xp_ref[...] = (jnp.dot(x, wih_ref[...], preferred_element_type=jnp.float32)
                 + bias_ref[...])

  whh = whh_ref[...]                                                  # (2H, 8H)

  # ---- trainable initials (tanh only on h0, matching PyTorch) ----
  h_cat = jnp.broadcast_to(jnp.tanh(init_ref[0:1, :]), (TB, 2 * H))   # [h_f | h_b]
  c_cat = jnp.broadcast_to(init_ref[1:2, :], (TB, 2 * H))             # [c_f | c_b]

  # ---- 2) fused fwd/bwd recurrence: ONE block-diag dot per serial step ----
  def step(s, carry):
    h_cat, c_cat = carry
    row_f = pl.multiple_of(s * TB, TB)              # fwd hidden lands at time s
    row_b = pl.multiple_of((S - 1 - s) * TB, TB)    # bwd hidden lands at time S-1-s
    # single lane-dense (TB, 128) gate slab: [i_f i_b f_f f_b o_f o_b g_f g_b]
    gates = (xp_ref[pl.ds(row_f, TB), :]
             + jnp.dot(h_cat, whh, preferred_element_type=jnp.float32))
    sig = jax.nn.sigmoid(gates[:, :6 * H])          # one wide EUP sigmoid push
    g = jnp.tanh(gates[:, 6 * H:])                  # one wide EUP tanh push
    c_cat = sig[:, 2 * H:4 * H] * c_cat + sig[:, :2 * H] * g
    h_cat = sig[:, 4 * H:6 * H] * jnp.tanh(c_cat)
    hidf_ref[pl.ds(row_f, TB), :] = h_cat[:, :H]    # lane offset 0, sublane aligned
    hidb_ref[pl.ds(row_b, TB), :] = h_cat[:, H:]    # lane offset 0, sublane aligned
    return h_cat, c_cat

  jax.lax.fori_loop(0, S, step, (h_cat, c_cat),
                    unroll=(S if S <= 16 else 4))

  # ---- 3) fused heads: ori_dir + jnt_lhs, 128-lane-dense output store ----
  out_ref[...] = (
      jnp.dot(hidf_ref[...], whead_f_ref[...], preferred_element_type=jnp.float32)
      + jnp.dot(hidb_ref[...], whead_b_ref[...], preferred_element_type=jnp.float32)
      + bhead_ref[...])


def _pack_lstm_weights(params, H, D):
  """Pack PyTorch LSTM weights (gate rows i,f,g,o) into the fused block-diag
  layout with gate columns [i_f i_b f_f f_b o_f o_b g_f g_b]."""
  f32 = jnp.float32
  src = {'i': 0, 'f': H, 'g': 2 * H, 'o': 3 * H}              # PyTorch col blocks
  wih_blk = jnp.zeros((2 * D, 8 * H), f32)
  whh_blk = jnp.zeros((2 * H, 8 * H), f32)
  bias = jnp.zeros((8 * H,), f32)
  for dirn, sfx in enumerate(('f', 'b')):                     # 0=fwd, 1=bwd
    wih = params[f'wih_{sfx}'].astype(f32).T                  # (D, 4H)
    whh = params[f'whh_{sfx}'].astype(f32).T                  # (H, 4H)
    b = (params[f'bih_{sfx}'] + params[f'bhh_{sfx}']).astype(f32)
    tgt = {'i': (0 + dirn) * H, 'f': (2 + dirn) * H,
           'o': (4 + dirn) * H, 'g': (6 + dirn) * H}
    ri, rh = dirn * D, dirn * H                               # block-diag row offsets
    for gname in ('i', 'f', 'g', 'o'):
      s0, t0 = src[gname], tgt[gname]
      wih_blk = wih_blk.at[ri:ri + D, t0:t0 + H].set(wih[:, s0:s0 + H])
      whh_blk = whh_blk.at[rh:rh + H, t0:t0 + H].set(whh[:, s0:s0 + H])
      bias = bias.at[t0:t0 + H].set(b[s0:s0 + H])
  return wih_blk, whh_blk, bias[None, :]


def dbstem_layer(unit_emb, params, *, thresholds, orient_bits=2, batch_tile=None):
  """One DBStem layer: Bi-LSTM orient emb + ori_dir + 'iadd' joint head + predictions."""
  B, S, D = unit_emb.shape
  H = params['h0'].shape[-1]
  OB = orient_bits
  HEAD = 128                      # pad fused head to a lane-dense 128-wide output
  f32 = jnp.float32

  # ---- batch tiling: pad B to a sublane-aligned tile, shard tiles over a grid ----
  if batch_tile is None:
    batch_tile = min(_round_up(B, 8), 128)
  TB = _round_up(batch_tile, 8)
  Bp = _round_up(B, TB)
  NT = Bp // TB

  # ---- input packing: time-major, bwd direction time-reversed, batch padded ----
  x_tm = jnp.transpose(unit_emb, (1, 0, 2)).astype(f32)         # (S, B, D)
  x_cat = jnp.concatenate([x_tm, x_tm[::-1]], axis=-1)          # (S, B, 2D)
  if Bp != B:
    x_cat = jnp.pad(x_cat, ((0, 0), (0, Bp - B), (0, 0)))
  # rows ordered (batch_tile, time, batch_in_tile) so each grid step gets one
  # contiguous (S*TB, 2D) block
  x_cat = (x_cat.reshape(S, NT, TB, 2 * D)
           .transpose(1, 0, 2, 3)
           .reshape(NT * S * TB, 2 * D))

  # ---- parameter packing (plain XLA, outside the kernel) ----
  h0 = params['h0'].reshape(2, H)
  c0 = params['c0'].reshape(2, H)
  init = jnp.stack([jnp.concatenate([h0[0], h0[1]]),
                    jnp.concatenate([c0[0], c0[1]])], axis=0).astype(f32)   # (2, 2H)

  wih_blk, whh_blk, bias = _pack_lstm_weights(params, H, D)

  # fused ori_dir + jnt_lhs head, split per direction, zero-padded to 128 lanes
  w_ori = params['w_ori'].astype(f32)              # (OB, 2H)  cols [fwd | bwd]
  w_jnt = params['w_jnt'].astype(f32)              # (1, 2H)
  whead_f = jnp.zeros((H, HEAD), f32)
  whead_f = whead_f.at[:, :OB].set(w_ori[:, :H].T)
  whead_f = whead_f.at[:, OB:OB + 1].set(w_jnt[:, :H].T)
  whead_b = jnp.zeros((H, HEAD), f32)
  whead_b = whead_b.at[:, :OB].set(w_ori[:, H:].T)
  whead_b = whead_b.at[:, OB:OB + 1].set(w_jnt[:, H:].T)
  bhead = jnp.zeros((1, HEAD), f32)
  bhead = bhead.at[0, :OB].set(params['b_ori'].astype(f32))
  bhead = bhead.at[0, OB].set(params['b_jnt'].astype(f32)[0])

  kernel = functools.partial(_dbstem_layer_kernel,
                             seq_len=S, batch_tile=TB, hidden=H)

  grid_spec = pltpu.PrefetchScalarGridSpec(
      num_scalar_prefetch=0,
      grid=(NT,),
      in_specs=[
          pl.BlockSpec((S * TB, 2 * D), lambda b: (b, 0)),     # x (per batch tile)
          pl.BlockSpec((2, 2 * H), lambda b: (0, 0)),          # init
          pl.BlockSpec((2 * D, 8 * H), lambda b: (0, 0)),      # wih_blk
          pl.BlockSpec((1, 8 * H), lambda b: (0, 0)),          # bias
          pl.BlockSpec((2 * H, 8 * H), lambda b: (0, 0)),      # whh_blk
          pl.BlockSpec((H, HEAD), lambda b: (0, 0)),           # whead_f
          pl.BlockSpec((H, HEAD), lambda b: (0, 0)),           # whead_b
          pl.BlockSpec((1, HEAD), lambda b: (0, 0)),           # bhead
      ],
      out_specs=pl.BlockSpec((S * TB, HEAD), lambda b: (b, 0)),
      scratch_shapes=[pltpu.VMEM((S * TB, 8 * H), f32),        # hoisted x-projection
                      pltpu.VMEM((S * TB, H), f32),            # hid_fwd
                      pltpu.VMEM((S * TB, H), f32)],           # hid_bwd
  )

  out = pl.pallas_call(
      kernel,
      out_shape=jax.ShapeDtypeStruct((NT * S * TB, HEAD), f32),
      grid_spec=grid_spec,
      # 32 MiB is safe on every chip (v7x physical VMEM = 64 MiB); production
      # shapes should size TB so S*TB*(8H+2H+...)*4B stays well inside this.
      compiler_params=pltpu.CompilerParams(
          dimension_semantics=("parallel",),
          vmem_limit_bytes=32 * 1024 * 1024),
  )(x_cat, init, wih_blk, bias, whh_blk, whead_f, whead_b, bhead)

  # ---- unpack lane-dense slab -> module outputs (tiny elementwise glue) ----
  out = (out.reshape(NT, S, TB, HEAD)
         .transpose(1, 0, 2, 3)
         .reshape(S, Bp, HEAD)[:, :B]
         .transpose(1, 0, 2))                                   # (B, S, HEAD)
  rd = out[:, :, :OB]                                           # right/direc logits
  j_all = out[:, :, OB]                                         # jnt_lhs(rd_hidden)
  joint = j_all[:, :-1] + j_all[:, 1:]                          # 'iadd' joint logits
  right = jax.nn.sigmoid(rd[:, :, 0]) > float(thresholds['right'])
  direc = jax.nn.sigmoid(rd[:, :, 1]) > float(thresholds['direc'])
  jmask = jax.nn.sigmoid(joint) > float(thresholds['joint'])
  return rd, joint, right, direc, jmask


def _reference(unit_emb, params, thresholds):
  """Plain-JAX reference mirroring the PyTorch math (for validation)."""
  x = unit_emb.astype(jnp.float32)
  B, S, _ = x.shape
  H = params['h0'].shape[-1]

  def cell(x_t, h, c, wih, whh, b):
    gates = x_t @ wih.T + h @ whh.T + b
    i = jax.nn.sigmoid(gates[:, :H])
    f = jax.nn.sigmoid(gates[:, H:2 * H])
    g = jnp.tanh(gates[:, 2 * H:3 * H])
    o = jax.nn.sigmoid(gates[:, 3 * H:])
    c = f * c + i * g
    h = o * jnp.tanh(c)
    return h, c

  h0 = jnp.tanh(params['h0'].reshape(2, H))
  c0 = params['c0'].reshape(2, H)
  b_f = params['bih_f'] + params['bhh_f']
  b_b = params['bih_b'] + params['bhh_b']

  h = jnp.broadcast_to(h0[0:1], (B, H)); c = jnp.broadcast_to(c0[0:1], (B, H))
  hf = []
  for t in range(S):
    h, c = cell(x[:, t], h, c, params['wih_f'], params['whh_f'], b_f)
    hf.append(h)
  h = jnp.broadcast_to(h0[1:2], (B, H)); c = jnp.broadcast_to(c0[1:2], (B, H))
  hb = [None] * S
  for t in range(S - 1, -1, -1):
    h, c = cell(x[:, t], h, c, params['wih_b'], params['whh_b'], b_b)
    hb[t] = h

  hid = jnp.concatenate([jnp.stack(hf, 1), jnp.stack(hb, 1)], axis=-1)  # (B,S,2H)
  rd = hid @ params['w_ori'].T + params['b_ori']                        # (B,S,2)
  j_all = (hid @ params['w_jnt'].T + params['b_jnt'])[..., 0]           # (B,S)
  joint = j_all[:, :-1] + j_all[:, 1:]                                  # (B,S-1)
  right = jax.nn.sigmoid(rd[:, :, 0]) > thresholds['right']
  direc = jax.nn.sigmoid(rd[:, :, 1]) > thresholds['direc']
  jmask = jax.nn.sigmoid(joint) > thresholds['joint']
  return rd, joint, right, direc, jmask


if __name__ == "__main__":
  # Small shapes consistent with DBStem: model_dim=32, orient_dim=32 (hidden=16),
  # num_layers=1, orient_bits=2 (sigmoid right + direc), joint_type='iadd'.
  B, S = 2, 8
  MODEL_DIM = 32
  ORIENT_DIM = 32
  H = ORIENT_DIM // 2
  ORIENT_BITS = 2
  thresholds = dict(right=0.5, joint=0.4, direc=0.5)

  key = jax.random.PRNGKey(0)
  ks = jax.random.split(key, 16)
  s = 0.1
  params = dict(
      h0=jax.random.normal(ks[0], (2, 1, H), jnp.float32),
      c0=jax.random.normal(ks[1], (2, 1, H), jnp.float32),
      wih_f=jax.random.normal(ks[2], (4 * H, MODEL_DIM), jnp.float32) * s,
      whh_f=jax.random.normal(ks[3], (4 * H, H), jnp.float32) * s,
      bih_f=jax.random.normal(ks[4], (4 * H,), jnp.float32) * s,
      bhh_f=jax.random.normal(ks[5], (4 * H,), jnp.float32) * s,
      wih_b=jax.random.normal(ks[6], (4 * H, MODEL_DIM), jnp.float32) * s,
      whh_b=jax.random.normal(ks[7], (4 * H, H), jnp.float32) * s,
      bih_b=jax.random.normal(ks[8], (4 * H,), jnp.float32) * s,
      bhh_b=jax.random.normal(ks[9], (4 * H,), jnp.float32) * s,
      w_ori=jax.random.normal(ks[10], (ORIENT_BITS, ORIENT_DIM), jnp.float32) * s,
      b_ori=jax.random.normal(ks[11], (ORIENT_BITS,), jnp.float32) * s,
      w_jnt=jax.random.normal(ks[12], (1, ORIENT_DIM), jnp.float32) * s,
      b_jnt=jax.random.normal(ks[13], (1,), jnp.float32) * s,
  )
  unit_emb = jax.random.normal(ks[14], (B, S, MODEL_DIM), jnp.float32)

  outs = jax.block_until_ready(
      dbstem_layer(unit_emb, params, thresholds=thresholds, orient_bits=ORIENT_BITS))
  refs = _reference(unit_emb, params, thresholds)

  names = ("right_direc", "joint", "right_mask", "direc_mask", "joint_mask")
  for name, got, want in zip(names, outs, refs):
    np.testing.assert_allclose(np.asarray(got, np.float32),
                               np.asarray(want, np.float32),
                               rtol=1e-3, atol=1e-3, err_msg=name)

  print("KERNEL_OK")
</pallas_src>

<mosaic_0001>
module attributes {stable_mosaic.version = 11 : i64} {
  func.func @_dbstem_layer_kernel(%arg0: i32, %arg1: memref<64x64xf32, #tpu.memory_space<vmem>>, %arg2: memref<2x32xf32, #tpu.memory_space<vmem>>, %arg3: memref<64x128xf32, #tpu.memory_space<vmem>>, %arg4: memref<1x128xf32, #tpu.memory_space<vmem>>, %arg5: memref<32x128xf32, #tpu.memory_space<vmem>>, %arg6: memref<16x128xf32, #tpu.memory_space<vmem>>, %arg7: memref<16x128xf32, #tpu.memory_space<vmem>>, %arg8: memref<1x128xf32, #tpu.memory_space<vmem>>, %arg9: memref<64x128xf32, #tpu.memory_space<vmem>>, %arg10: memref<64x128xf32, #tpu.memory_space<vmem>>, %arg11: memref<64x16xf32, #tpu.memory_space<vmem>>, %arg12: memref<64x16xf32, #tpu.memory_space<vmem>>) attributes {dimension_semantics = [#tpu.dimension_semantics<parallel>], iteration_bounds = array<i64: 1>, scalar_prefetch = 0 : i64, scratch_operands = 3 : i64, tpu.core_type = #tpu.core_type<tc>, window_params = [{transform_indices = @transform_0, window_bounds = array<i64: 64, 64>}, {pipeline_mode = #tpu.pipeline_mode<synchronous>, transform_indices = @transform_1, window_bounds = array<i64: 2, 32>}, {pipeline_mode = #tpu.pipeline_mode<synchronous>, transform_indices = @transform_2, window_bounds = array<i64: 64, 128>}, {pipeline_mode = #tpu.pipeline_mode<synchronous>, transform_indices = @transform_3, window_bounds = array<i64: 1, 128>}, {pipeline_mode = #tpu.pipeline_mode<synchronous>, transform_indices = @transform_4, window_bounds = array<i64: 32, 128>}, {pipeline_mode = #tpu.pipeline_mode<synchronous>, transform_indices = @transform_5, window_bounds = array<i64: 16, 128>}, {pipeline_mode = #tpu.pipeline_mode<synchronous>, transform_indices = @transform_6, window_bounds = array<i64: 16, 128>}, {pipeline_mode = #tpu.pipeline_mode<synchronous>, transform_indices = @transform_7, window_bounds = array<i64: 1, 128>}, {transform_indices = @transform_8, window_bounds = array<i64: 64, 128>}]} {
    %c0 = arith.constant 0 : index
    %c0_0 = arith.constant 0 : index
    %0 = vector.load %arg1[%c0, %c0_0] : memref<64x64xf32, #tpu.memory_space<vmem>>, vector<64x64xf32>
    %c0_1 = arith.constant 0 : index
    %c0_2 = arith.constant 0 : index
    %1 = vector.load %arg3[%c0_1, %c0_2] : memref<64x128xf32, #tpu.memory_space<vmem>>, vector<64x128xf32>
    %cst = arith.constant dense<0.000000e+00> : vector<64x128xf32>
    %2 = tpu.matmul %0, %1, %cst {dimension_numbers = #tpu.dot_dimension_numbers<[1], [0], [0], [1], [0, 0, 1, 1], [], []>} : vector<64x64xf32>, vector<64x128xf32>, vector<64x128xf32> -> vector<64x128xf32>
    %c0_3 = arith.constant 0 : index
    %c0_4 = arith.constant 0 : index
    %3 = vector.load %arg4[%c0_3, %c0_4] : memref<1x128xf32, #tpu.memory_space<vmem>>, vector<1x128xf32>
    %4 = vector.broadcast %3 : vector<1x128xf32> to vector<64x128xf32>
    %5 = arith.addf %2, %4 : vector<64x128xf32>
    %c0_5 = arith.constant 0 : index
    %c0_6 = arith.constant 0 : index
    %6 = vector.load %arg10[%c0_5, %c0_6] : memref<64x128xf32, #tpu.memory_space<vmem>>, vector<64x128xf32>
    tpu.vector_store %arg10[%c0_5, %c0_6], %5 {strides = array<i32>} : memref<64x128xf32, #tpu.memory_space<vmem>>, vector<64x128xf32>,
    %c0_7 = arith.constant 0 : index
    %c0_8 = arith.constant 0 : index
    %7 = vector.load %arg5[%c0_7, %c0_8] : memref<32x128xf32, #tpu.memory_space<vmem>>, vector<32x128xf32>
    %c0_9 = arith.constant 0 : index
    %c0_10 = arith.constant 0 : index
    %8 = vector.load %arg2[%c0_9, %c0_10] : memref<2x32xf32, #tpu.memory_space<vmem>>, vector<1x32xf32>
    %9 = math.tanh %8 : vector<1x32xf32>
    %10 = vector.shape_cast %9 : vector<1x32xf32> to vector<1x32xf32>
    %11 = vector.broadcast %10 : vector<1x32xf32> to vector<8x32xf32>
    %c1 = arith.constant 1 : index
    %c0_11 = arith.constant 0 : index
    %12 = vector.load %arg2[%c1, %c0_11] : memref<2x32xf32, #tpu.memory_space<vmem>>, vector<1x32xf32>
    %13 = vector.shape_cast %12 : vector<1x32xf32> to vector<1x32xf32>
    %14 = vector.broadcast %13 : vector<1x32xf32> to vector<8x32xf32>
    %c0_i32 = arith.constant 0 : i32
    %c8_i32 = arith.constant 8 : i32
    %15 = arith.muli %c0_i32, %c8_i32 : i32
    %16 = tpu.assume_multiple %15, 8 : i32
    %c7_i32 = arith.constant 7 : i32
    %17 = arith.subi %c7_i32, %c0_i32 : i32
    %c8_i32_12 = arith.constant 8 : i32
    %18 = arith.muli %17, %c8_i32_12 : i32
    %19 = tpu.assume_multiple %18, 8 : i32
    %20 = arith.index_cast %16 : i32 to index
    %c0_13 = arith.constant 0 : index
    %21 = vector.load %arg10[%20, %c0_13] : memref<64x128xf32, #tpu.memory_space<vmem>>, vector<8x128xf32>
    %cst_14 = arith.constant dense<0.000000e+00> : vector<8x128xf32>
    %22 = tpu.matmul %11, %7, %cst_14 {dimension_numbers = #tpu.dot_dimension_numbers<[1], [0], [0], [1], [0, 0, 1, 1], [], []>} : vector<8x32xf32>, vector<32x128xf32>, vector<8x128xf32> -> vector<8x128xf32>
    %23 = arith.addf %21, %22 : vector<8x128xf32>
    %24 = vector.extract_strided_slice %23 {offsets = [0, 0], sizes = [8, 96], strides = [1, 1]} : vector<8x128xf32> to vector<8x96xf32>
    %25 = arith.negf %24 : vector<8x96xf32>
    %26 = math.exp %25 : vector<8x96xf32>
    %cst_15 = arith.constant 1.000000e+00 : f32
    %27 = vector.broadcast %cst_15 : f32 to vector<8x96xf32>
    %28 = arith.addf %27, %26 : vector<8x96xf32>
    %29 = arith.divf %27, %28 : vector<8x96xf32>
    %30 = vector.extract_strided_slice %23 {offsets = [0, 96], sizes = [8, 32], strides = [1, 1]} : vector<8x128xf32> to vector<8x32xf32>
    %31 = math.tanh %30 : vector<8x32xf32>
    %32 = vector.extract_strided_slice %29 {offsets = [0, 32], sizes = [8, 32], strides = [1, 1]} : vector<8x96xf32> to vector<8x32xf32>
    %33 = arith.mulf %32, %14 : vector<8x32xf32>
    %34 = vector.extract_strided_slice %29 {offsets = [0, 0], sizes = [8, 32], strides = [1, 1]} : vector<8x96xf32> to vector<8x32xf32>
    %35 = arith.mulf %34, %31 : vector<8x32xf32>
    %36 = arith.addf %33, %35 : vector<8x32xf32>
    %37 = vector.extract_strided_slice %29 {offsets = [0, 64], sizes = [8, 32], strides = [1, 1]} : vector<8x96xf32> to vector<8x32xf32>
    %38 = math.tanh %36 : vector<8x32xf32>
    %39 = arith.mulf %37, %38 : vector<8x32xf32>
    %40 = vector.extract_strided_slice %39 {offsets = [0, 0], sizes = [8, 16], strides = [1, 1]} : vector<8x32xf32> to vector<8x16xf32>
    %41 = arith.index_cast %16 : i32 to index
    %c0_16 = arith.constant 0 : index
    %42 = vector.load %arg11[%41, %c0_16] : memref<64x16xf32, #tpu.memory_space<vmem>>, vector<8x16xf32>
    tpu.vector_store %arg11[%41, %c0_16], %40 {strides = array<i32>} : memref<64x16xf32, #tpu.memory_space<vmem>>, vector<8x16xf32>,
    %43 = vector.extract_strided_slice %39 {offsets = [0, 16], sizes = [8, 16], strides = [1, 1]} : vector<8x32xf32> to vector<8x16xf32>
    %44 = arith.index_cast %19 : i32 to index
    %c0_17 = arith.constant 0 : index
    %45 = vector.load %arg12[%44, %c0_17] : memref<64x16xf32, #tpu.memory_space<vmem>>, vector<8x16xf32>
    tpu.vector_store %arg12[%44, %c0_17], %43 {strides = array<i32>} : memref<64x16xf32, #tpu.memory_space<vmem>>, vector<8x16xf32>,
    %c1_i32 = arith.constant 1 : i32
    %c8_i32_18 = arith.constant 8 : i32
    %46 = arith.muli %c1_i32, %c8_i32_18 : i32
    %47 = tpu.assume_multiple %46, 8 : i32
    %c7_i32_19 = arith.constant 7 : i32
    %48 = arith.subi %c7_i32_19, %c1_i32 : i32
    %c8_i32_20 = arith.constant 8 : i32
    %49 = arith.muli %48, %c8_i32_20 : i32
    %50 = tpu.assume_multiple %49, 8 : i32
    %51 = arith.index_cast %47 : i32 to index
    %c0_21 = arith.constant 0 : index
    %52 = vector.load %arg10[%51, %c0_21] : memref<64x128xf32, #tpu.memory_space<vmem>>, vector<8x128xf32>
    %cst_22 = arith.constant dense<0.000000e+00> : vector<8x128xf32>
    %53 = tpu.matmul %39, %7, %cst_22 {dimension_numbers = #tpu.dot_dimension_numbers<[1], [0], [0], [1], [0, 0, 1, 1], [], []>} : vector<8x32xf32>, vector<32x128xf32>, vector<8x128xf32> -> vector<8x128xf32>
    %54 = arith.addf %52, %53 : vector<8x128xf32>
    %55 = vector.extract_strided_slice %54 {offsets = [0, 0], sizes = [8, 96], strides = [1, 1]} : vector<8x128xf32> to vector<8x96xf32>
    %56 = arith.negf %55 : vector<8x96xf32>
    %57 = math.exp %56 : vector<8x96xf32>
    %cst_23 = arith.constant 1.000000e+00 : f32
    %58 = vector.broadcast %cst_23 : f32 to vector<8x96xf32>
    %59 = arith.addf %58, %57 : vector<8x96xf32>
    %60 = arith.divf %58, %59 : vector<8x96xf32>
    %61 = vector.extract_strided_slice %54 {offsets = [0, 96], sizes = [8, 32], strides = [1, 1]} : vector<8x128xf32> to vector<8x32xf32>
    %62 = math.tanh %61 : vector<8x32xf32>
    %63 = vector.extract_strided_slice %60 {offsets = [0, 32], sizes = [8, 32], strides = [1, 1]} : vector<8x96xf32> to vector<8x32xf32>
    %64 = arith.mulf %63, %36 : vector<8x32xf32>
    %65 = vector.extract_strided_slice %60 {offsets = [0, 0], sizes = [8, 32], strides = [1, 1]} : vector<8x96xf32> to vector<8x32xf32>
    %66 = arith.mulf %65, %62 : vector<8x32xf32>
    %67 = arith.addf %64, %66 : vector<8x32xf32>
    %68 = vector.extract_strided_slice %60 {offsets = [0, 64], sizes = [8, 32], strides = [1, 1]} : vector<8x96xf32> to vector<8x32xf32>
    %69 = math.tanh %67 : vector<8x32xf32>
    %70 = arith.mulf %68, %69 : vector<8x32xf32>
    %71 = vector.extract_strided_slice %70 {offsets = [0, 0], sizes = [8, 16], strides = [1, 1]} : vector<8x32xf32> to vector<8x16xf32>
    %72 = arith.index_cast %47 : i32 to index
    %c0_24 = arith.constant 0 : index
    %73 = vector.load %arg11[%72, %c0_24] : memref<64x16xf32, #tpu.memory_space<vmem>>, vector<8x16xf32>
    tpu.vector_store %arg11[%72, %c0_24], %71 {strides = array<i32>} : memref<64x16xf32, #tpu.memory_space<vmem>>, vector<8x16xf32>,
    %74 = vector.extract_strided_slice %70 {offsets = [0, 16], sizes = [8, 16], strides = [1, 1]} : vector<8x32xf32> to vector<8x16xf32>
    %75 = arith.index_cast %50 : i32 to index
    %c0_25 = arith.constant 0 : index
    %76 = vector.load %arg12[%75, %c0_25] : memref<64x16xf32, #tpu.memory_space<vmem>>, vector<8x16xf32>
    tpu.vector_store %arg12[%75, %c0_25], %74 {strides = array<i32>} : memref<64x16xf32, #tpu.memory_space<vmem>>, vector<8x16xf32>,
    %c2_i32 = arith.constant 2 : i32
    %c8_i32_26 = arith.constant 8 : i32
    %77 = arith.muli %c2_i32, %c8_i32_26 : i32
    %78 = tpu.assume_multiple %77, 8 : i32
    %c7_i32_27 = arith.constant 7 : i32
    %79 = arith.subi %c7_i32_27, %c2_i32 : i32
    %c8_i32_28 = arith.constant 8 : i32
    %80 = arith.muli %79, %c8_i32_28 : i32
    %81 = tpu.assume_multiple %80, 8 : i32
    %82 = arith.index_cast %78 : i32 to index
    %c0_29 = arith.constant 0 : index
    %83 = vector.load %arg10[%82, %c0_29] : memref<64x128xf32, #tpu.memory_space<vmem>>, vector<8x128xf32>
    %cst_30 = arith.constant dense<0.000000e+00> : vector<8x128xf32>
    %84 = tpu.matmul %70, %7, %cst_30 {dimension_numbers = #tpu.dot_dimension_numbers<[1], [0], [0], [1], [0, 0, 1, 1], [], []>} : vector<8x32xf32>, vector<32x128xf32>, vector<8x128xf32> -> vector<8x128xf32>
    %85 = arith.addf %83, %84 : vector<8x128xf32>
    %86 = vector.extract_strided_slice %85 {offsets = [0, 0], sizes = [8, 96], strides = [1, 1]} : vector<8x128xf32> to vector<8x96xf32>
    %87 = arith.negf %86 : vector<8x96xf32>
    %88 = math.exp %87 : vector<8x96xf32>
    %cst_31 = arith.constant 1.000000e+00 : f32
    %89 = vector.broadcast %cst_31 : f32 to vector<8x96xf32>
    %90 = arith.addf %89, %88 : vector<8x96xf32>
    %91 = arith.divf %89, %90 : vector<8x96xf32>
    %92 = vector.extract_strided_slice %85 {offsets = [0, 96], sizes = [8, 32], strides = [1, 1]} : vector<8x128xf32> to vector<8x32xf32>
    %93 = math.tanh %92 : vector<8x32xf32>
    %94 = vector.extract_strided_slice %91 {offsets = [0, 32], sizes = [8, 32], strides = [1, 1]} : vector<8x96xf32> to vector<8x32xf32>
    %95 = arith.mulf %94, %67 : vector<8x32xf32>
    %96 = vector.extract_strided_slice %91 {offsets = [0, 0], sizes = [8, 32], strides = [1, 1]} : vector<8x96xf32> to vector<8x32xf32>
    %97 = arith.mulf %96, %93 : vector<8x32xf32>
    %98 = arith.addf %95, %97 : vector<8x32xf32>
    %99 = vector.extract_strided_slice %91 {offsets = [0, 64], sizes = [8, 32], strides = [1, 1]} : vector<8x96xf32> to vector<8x32xf32>
    %100 = math.tanh %98 : vector<8x32xf32>
    %101 = arith.mulf %99, %100 : vector<8x32xf32>
    %102 = vector.extract_strided_slice %101 {offsets = [0, 0], sizes = [8, 16], strides = [1, 1]} : vector<8x32xf32> to vector<8x16xf32>
    %103 = arith.index_cast %78 : i32 to index
    %c0_32 = arith.constant 0 : index
    %104 = vector.load %arg11[%103, %c0_32] : memref<64x16xf32, #tpu.memory_space<vmem>>, vector<8x16xf32>
    tpu.vector_store %arg11[%103, %c0_32], %102 {strides = array<i32>} : memref<64x16xf32, #tpu.memory_space<vmem>>, vector<8x16xf32>,
    %105 = vector.extract_strided_slice %101 {offsets = [0, 16], sizes = [8, 16], strides = [1, 1]} : vector<8x32xf32> to vector<8x16xf32>
    %106 = arith.index_cast %81 : i32 to index
    %c0_33 = arith.constant 0 : index
    %107 = vector.load %arg12[%106, %c0_33] : memref<64x16xf32, #tpu.memory_space<vmem>>, vector<8x16xf32>
    tpu.vector_store %arg12[%106, %c0_33], %105 {strides = array<i32>} : memref<64x16xf32, #tpu.memory_space<vmem>>, vector<8x16xf32>,
    %c3_i32 = arith.constant 3 : i32
    %c8_i32_34 = arith.constant 8 : i32
    %108 = arith.muli %c3_i32, %c8_i32_34 : i32
    %109 = tpu.assume_multiple %108, 8 : i32
    %c7_i32_35 = arith.constant 7 : i32
    %110 = arith.subi %c7_i32_35, %c3_i32 : i32
    %c8_i32_36 = arith.constant 8 : i32
    %111 = arith.muli %110, %c8_i32_36 : i32
    %112 = tpu.assume_multiple %111, 8 : i32
    %113 = arith.index_cast %109 : i32 to index
    %c0_37 = arith.constant 0 : index
    %114 = vector.load %arg10[%113, %c0_37] : memref<64x128xf32, #tpu.memory_space<vmem>>, vector<8x128xf32>
    %cst_38 = arith.constant dense<0.000000e+00> : vector<8x128xf32>
    %115 = tpu.matmul %101, %7, %cst_38 {dimension_numbers = #tpu.dot_dimension_numbers<[1], [0], [0], [1], [0, 0, 1, 1], [], []>} : vector<8x32xf32>, vector<32x128xf32>, vector<8x128xf32> -> vector<8x128xf32>
    %116 = arith.addf %114, %115 : vector<8x128xf32>
    %117 = vector.extract_strided_slice %116 {offsets = [0, 0], sizes = [8, 96], strides = [1, 1]} : vector<8x128xf32> to vector<8x96xf32>
    %118 = arith.negf %117 : vector<8x96xf32>
    %119 = math.exp %118 : vector<8x96xf32>
    %cst_39 = arith.constant 1.000000e+00 : f32
    %120 = vector.broadcast %cst_39 : f32 to vector<8x96xf32>
    %121 = arith.addf %120, %119 : vector<8x96xf32>
    %122 = arith.divf %120, %121 : vector<8x96xf32>
    %123 = vector.extract_strided_slice %116 {offsets = [0, 96], sizes = [8, 32], strides = [1, 1]} : vector<8x128xf32> to vector<8x32xf32>
    %124 = math.tanh %123 : vector<8x32xf32>
    %125 = vector.extract_strided_slice %122 {offsets = [0, 32], sizes = [8, 32], strides = [1, 1]} : vector<8x96xf32> to vector<8x32xf32>
    %126 = arith.mulf %125, %98 : vector<8x32xf32>
    %127 = vector.extract_strided_slice %122 {offsets = [0, 0], sizes = [8, 32], strides = [1, 1]} : vector<8x96xf32> to vector<8x32xf32>
    %128 = arith.mulf %127, %124 : vector<8x32xf32>
    %129 = arith.addf %126, %128 : vector<8x32xf32>
    %130 = vector.extract_strided_slice %122 {offsets = [0, 64], sizes = [8, 32], strides = [1, 1]} : vector<8x96xf32> to vector<8x32xf32>
    %131 = math.tanh %129 : vector<8x32xf32>
    %132 = arith.mulf %130, %131 : vector<8x32xf32>
    %133 = vector.extract_strided_slice %132 {offsets = [0, 0], sizes = [8, 16], strides = [1, 1]} : vector<8x32xf32> to vector<8x16xf32>
    %134 = arith.index_cast %109 : i32 to index
    %c0_40 = arith.constant 0 : index
    %135 = vector.load %arg11[%134, %c0_40] : memref<64x16xf32, #tpu.memory_space<vmem>>, vector<8x16xf32>
    tpu.vector_store %arg11[%134, %c0_40], %133 {strides = array<i32>} : memref<64x16xf32, #tpu.memory_space<vmem>>, vector<8x16xf32>,
    %136 = vector.extract_strided_slice %132 {offsets = [0, 16], sizes = [8, 16], strides = [1, 1]} : vector<8x32xf32> to vector<8x16xf32>
    %137 = arith.index_cast %112 : i32 to index
    %c0_41 = arith.constant 0 : index
    %138 = vector.load %arg12[%137, %c0_41] : memref<64x16xf32, #tpu.memory_space<vmem>>, vector<8x16xf32>
    tpu.vector_store %arg12[%137, %c0_41], %136 {strides = array<i32>} : memref<64x16xf32, #tpu.memory_space<vmem>>, vector<8x16xf32>,
    %c4_i32 = arith.constant 4 : i32
    %c8_i32_42 = arith.constant 8 : i32
    %139 = arith.muli %c4_i32, %c8_i32_42 : i32
    %140 = tpu.assume_multiple %139, 8 : i32
    %c7_i32_43 = arith.constant 7 : i32
    %141 = arith.subi %c7_i32_43, %c4_i32 : i32
    %c8_i32_44 = arith.constant 8 : i32
    %142 = arith.muli %141, %c8_i32_44 : i32
    %143 = tpu.assume_multiple %142, 8 : i32
    %144 = arith.index_cast %140 : i32 to index
    %c0_45 = arith.constant 0 : index
    %145 = vector.load %arg10[%144, %c0_45] : memref<64x128xf32, #tpu.memory_space<vmem>>, vector<8x128xf32>
    %cst_46 = arith.constant dense<0.000000e+00> : vector<8x128xf32>
    %146 = tpu.matmul %132, %7, %cst_46 {dimension_numbers = #tpu.dot_dimension_numbers<[1], [0], [0], [1], [0, 0, 1, 1], [], []>} : vector<8x32xf32>, vector<32x128xf32>, vector<8x128xf32> -> vector<8x128xf32>
    %147 = arith.addf %145, %146 : vector<8x128xf32>
    %148 = vector.extract_strided_slice %147 {offsets = [0, 0], sizes = [8, 96], strides = [1, 1]} : vector<8x128xf32> to vector<8x96xf32>
    %149 = arith.negf %148 : vector<8x96xf32>
    %150 = math.exp %149 : vector<8x96xf32>
    %cst_47 = arith.constant 1.000000e+00 : f32
    %151 = vector.broadcast %cst_47 : f32 to vector<8x96xf32>
    %152 = arith.addf %151, %150 : vector<8x96xf32>
    %153 = arith.divf %151, %152 : vector<8x96xf32>
    %154 = vector.extract_strided_slice %147 {offsets = [0, 96], sizes = [8, 32], strides = [1, 1]} : vector<8x128xf32> to vector<8x32xf32>
    %155 = math.tanh %154 : vector<8x32xf32>
    %156 = vector.extract_strided_slice %153 {offsets = [0, 32], sizes = [8, 32], strides = [1, 1]} : vector<8x96xf32> to vector<8x32xf32>
    %157 = arith.mulf %156, %129 : vector<8x32xf32>
    %158 = vector.extract_strided_slice %153 {offsets = [0, 0], sizes = [8, 32], strides = [1, 1]} : vector<8x96xf32> to vector<8x32xf32>
    %159 = arith.mulf %158, %155 : vector<8x32xf32>
    %160 = arith.addf %157, %159 : vector<8x32xf32>
    %161 = vector.extract_strided_slice %153 {offsets = [0, 64], sizes = [8, 32], strides = [1, 1]} : vector<8x96xf32> to vector<8x32xf32>
    %162 = math.tanh %160 : vector<8x32xf32>
    %163 = arith.mulf %161, %162 : vector<8x32xf32>
    %164 = vector.extract_strided_slice %163 {offsets = [0, 0], sizes = [8, 16], strides = [1, 1]} : vector<8x32xf32> to vector<8x16xf32>
    %165 = arith.index_cast %140 : i32 to index
    %c0_48 = arith.constant 0 : index
    %166 = vector.load %arg11[%165, %c0_48] : memref<64x16xf32, #tpu.memory_space<vmem>>, vector<8x16xf32>
    tpu.vector_store %arg11[%165, %c0_48], %164 {strides = array<i32>} : memref<64x16xf32, #tpu.memory_space<vmem>>, vector<8x16xf32>,
    %167 = vector.extract_strided_slice %163 {offsets = [0, 16], sizes = [8, 16], strides = [1, 1]} : vector<8x32xf32> to vector<8x16xf32>
    %168 = arith.index_cast %143 : i32 to index
    %c0_49 = arith.constant 0 : index
    %169 = vector.load %arg12[%168, %c0_49] : memref<64x16xf32, #tpu.memory_space<vmem>>, vector<8x16xf32>
    tpu.vector_store %arg12[%168, %c0_49], %167 {strides = array<i32>} : memref<64x16xf32, #tpu.memory_space<vmem>>, vector<8x16xf32>,
    %c5_i32 = arith.constant 5 : i32
    %c8_i32_50 = arith.constant 8 : i32
    %170 = arith.muli %c5_i32, %c8_i32_50 : i32
    %171 = tpu.assume_multiple %170, 8 : i32
    %c7_i32_51 = arith.constant 7 : i32
    %172 = arith.subi %c7_i32_51, %c5_i32 : i32
    %c8_i32_52 = arith.constant 8 : i32
    %173 = arith.muli %172, %c8_i32_52 : i32
    %174 = tpu.assume_multiple %173, 8 : i32
    %175 = arith.index_cast %171 : i32 to index
    %c0_53 = arith.constant 0 : index
    %176 = vector.load %arg10[%175, %c0_53] : memref<64x128xf32, #tpu.memory_space<vmem>>, vector<8x128xf32>
    %cst_54 = arith.constant dense<0.000000e+00> : vector<8x128xf32>
    %177 = tpu.matmul %163, %7, %cst_54 {dimension_numbers = #tpu.dot_dimension_numbers<[1], [0], [0], [1], [0, 0, 1, 1], [], []>} : vector<8x32xf32>, vector<32x128xf32>, vector<8x128xf32> -> vector<8x128xf32>
    %178 = arith.addf %176, %177 : vector<8x128xf32>
    %179 = vector.extract_strided_slice %178 {offsets = [0, 0], sizes = [8, 96], strides = [1, 1]} : vector<8x128xf32> to vector<8x96xf32>
    %180 = arith.negf %179 : vector<8x96xf32>
    %181 = math.exp %180 : vector<8x96xf32>
    %cst_55 = arith.constant 1.000000e+00 : f32
    %182 = vector.broadcast %cst_55 : f32 to vector<8x96xf32>
    %183 = arith.addf %182, %181 : vector<8x96xf32>
    %184 = arith.divf %182, %183 : vector<8x96xf32>
    %185 = vector.extract_strided_slice %178 {offsets = [0, 96], sizes = [8, 32], strides = [1, 1]} : vector<8x128xf32> to vector<8x32xf32>
    %186 = math.tanh %185 : vector<8x32xf32>
    %187 = vector.extract_strided_slice %184 {offsets = [0, 32], sizes = [8, 32], strides = [1, 1]} : vector<8x96xf32> to vector<8x32xf32>
    %188 = arith.mulf %187, %160 : vector<8x32xf32>
    %189 = vector.extract_strided_slice %184 {offsets = [0, 0], sizes = [8, 32], strides = [1, 1]} : vector<8x96xf32> to vector<8x32xf32>
    %190 = arith.mulf %189, %186 : vector<8x32xf32>
    %191 = arith.addf %188, %190 : vector<8x32xf32>
    %192 = vector.extract_strided_slice %184 {offsets = [0, 64], sizes = [8, 32], strides = [1, 1]} : vector<8x96xf32> to vector<8x32xf32>
    %193 = math.tanh %191 : vector<8x32xf32>
    %194 = arith.mulf %192, %193 : vector<8x32xf32>
    %195 = vector.extract_strided_slice %194 {offsets = [0, 0], sizes = [8, 16], strides = [1, 1]} : vector<8x32xf32> to vector<8x16xf32>
    %196 = arith.index_cast %171 : i32 to index
    %c0_56 = arith.constant 0 : index
    %197 = vector.load %arg11[%196, %c0_56] : memref<64x16xf32, #tpu.memory_space<vmem>>, vector<8x16xf32>
    tpu.vector_store %arg11[%196, %c0_56], %195 {strides = array<i32>} : memref<64x16xf32, #tpu.memory_space<vmem>>, vector<8x16xf32>,
    %198 = vector.extract_strided_slice %194 {offsets = [0, 16], sizes = [8, 16], strides = [1, 1]} : vector<8x32xf32> to vector<8x16xf32>
    %199 = arith.index_cast %174 : i32 to index
    %c0_57 = arith.constant 0 : index
    %200 = vector.load %arg12[%199, %c0_57] : memref<64x16xf32, #tpu.memory_space<vmem>>, vector<8x16xf32>
    tpu.vector_store %arg12[%199, %c0_57], %198 {strides = array<i32>} : memref<64x16xf32, #tpu.memory_space<vmem>>, vector<8x16xf32>,
    %c6_i32 = arith.constant 6 : i32
    %c8_i32_58 = arith.constant 8 : i32
    %201 = arith.muli %c6_i32, %c8_i32_58 : i32
    %202 = tpu.assume_multiple %201, 8 : i32
    %c7_i32_59 = arith.constant 7 : i32
    %203 = arith.subi %c7_i32_59, %c6_i32 : i32
    %c8_i32_60 = arith.constant 8 : i32
    %204 = arith.muli %203, %c8_i32_60 : i32
    %205 = tpu.assume_multiple %204, 8 : i32
    %206 = arith.index_cast %202 : i32 to index
    %c0_61 = arith.constant 0 : index
    %207 = vector.load %arg10[%206, %c0_61] : memref<64x128xf32, #tpu.memory_space<vmem>>, vector<8x128xf32>
    %cst_62 = arith.constant dense<0.000000e+00> : vector<8x128xf32>
    %208 = tpu.matmul %194, %7, %cst_62 {dimension_numbers = #tpu.dot_dimension_numbers<[1], [0], [0], [1], [0, 0, 1, 1], [], []>} : vector<8x32xf32>, vector<32x128xf32>, vector<8x128xf32> -> vector<8x128xf32>
    %209 = arith.addf %207, %208 : vector<8x128xf32>
    %210 = vector.extract_strided_slice %209 {offsets = [0, 0], sizes = [8, 96], strides = [1, 1]} : vector<8x128xf32> to vector<8x96xf32>
    %211 = arith.negf %210 : vector<8x96xf32>
    %212 = math.exp %211 : vector<8x96xf32>
    %cst_63 = arith.constant 1.000000e+00 : f32
    %213 = vector.broadcast %cst_63 : f32 to vector<8x96xf32>
    %214 = arith.addf %213, %212 : vector<8x96xf32>
    %215 = arith.divf %213, %214 : vector<8x96xf32>
    %216 = vector.extract_strided_slice %209 {offsets = [0, 96], sizes = [8, 32], strides = [1, 1]} : vector<8x128xf32> to vector<8x32xf32>
    %217 = math.tanh %216 : vector<8x32xf32>
    %218 = vector.extract_strided_slice %215 {offsets = [0, 32], sizes = [8, 32], strides = [1, 1]} : vector<8x96xf32> to vector<8x32xf32>
    %219 = arith.mulf %218, %191 : vector<8x32xf32>
    %220 = vector.extract_strided_slice %215 {offsets = [0, 0], sizes = [8, 32], strides = [1, 1]} : vector<8x96xf32> to vector<8x32xf32>
    %221 = arith.mulf %220, %217 : vector<8x32xf32>
    %222 = arith.addf %219, %221 : vector<8x32xf32>
    %223 = vector.extract_strided_slice %215 {offsets = [0, 64], sizes = [8, 32], strides = [1, 1]} : vector<8x96xf32> to vector<8x32xf32>
    %224 = math.tanh %222 : vector<8x32xf32>
    %225 = arith.mulf %223, %224 : vector<8x32xf32>
    %226 = vector.extract_strided_slice %225 {offsets = [0, 0], sizes = [8, 16], strides = [1, 1]} : vector<8x32xf32> to vector<8x16xf32>
    %227 = arith.index_cast %202 : i32 to index
    %c0_64 = arith.constant 0 : index
    %228 = vector.load %arg11[%227, %c0_64] : memref<64x16xf32, #tpu.memory_space<vmem>>, vector<8x16xf32>
    tpu.vector_store %arg11[%227, %c0_64], %226 {strides = array<i32>} : memref<64x16xf32, #tpu.memory_space<vmem>>, vector<8x16xf32>,
    %229 = vector.extract_strided_slice %225 {offsets = [0, 16], sizes = [8, 16], strides = [1, 1]} : vector<8x32xf32> to vector<8x16xf32>
    %230 = arith.index_cast %205 : i32 to index
    %c0_65 = arith.constant 0 : index
    %231 = vector.load %arg12[%230, %c0_65] : memref<64x16xf32, #tpu.memory_space<vmem>>, vector<8x16xf32>
    tpu.vector_store %arg12[%230, %c0_65], %229 {strides = array<i32>} : memref<64x16xf32, #tpu.memory_space<vmem>>, vector<8x16xf32>,
    %c7_i32_66 = arith.constant 7 : i32
    %c8_i32_67 = arith.constant 8 : i32
    %232 = arith.muli %c7_i32_66, %c8_i32_67 : i32
    %233 = tpu.assume_multiple %232, 8 : i32
    %c7_i32_68 = arith.constant 7 : i32
    %234 = arith.subi %c7_i32_68, %c7_i32_66 : i32
    %c8_i32_69 = arith.constant 8 : i32
    %235 = arith.muli %234, %c8_i32_69 : i32
    %236 = tpu.assume_multiple %235, 8 : i32
    %237 = arith.index_cast %233 : i32 to index
    %c0_70 = arith.constant 0 : index
    %238 = vector.load %arg10[%237, %c0_70] : memref<64x128xf32, #tpu.memory_space<vmem>>, vector<8x128xf32>
    %cst_71 = arith.constant dense<0.000000e+00> : vector<8x128xf32>
    %239 = tpu.matmul %225, %7, %cst_71 {dimension_numbers = #tpu.dot_dimension_numbers<[1], [0], [0], [1], [0, 0, 1, 1], [], []>} : vector<8x32xf32>, vector<32x128xf32>, vector<8x128xf32> -> vector<8x128xf32>
    %240 = arith.addf %238, %239 : vector<8x128xf32>
    %241 = vector.extract_strided_slice %240 {offsets = [0, 0], sizes = [8, 96], strides = [1, 1]} : vector<8x128xf32> to vector<8x96xf32>
    %242 = arith.negf %241 : vector<8x96xf32>
    %243 = math.exp %242 : vector<8x96xf32>
    %cst_72 = arith.constant 1.000000e+00 : f32
    %244 = vector.broadcast %cst_72 : f32 to vector<8x96xf32>
    %245 = arith.addf %244, %243 : vector<8x96xf32>
    %246 = arith.divf %244, %245 : vector<8x96xf32>
    %247 = vector.extract_strided_slice %240 {offsets = [0, 96], sizes = [8, 32], strides = [1, 1]} : vector<8x128xf32> to vector<8x32xf32>
    %248 = math.tanh %247 : vector<8x32xf32>
    %249 = vector.extract_strided_slice %246 {offsets = [0, 32], sizes = [8, 32], strides = [1, 1]} : vector<8x96xf32> to vector<8x32xf32>
    %250 = arith.mulf %249, %222 : vector<8x32xf32>
    %251 = vector.extract_strided_slice %246 {offsets = [0, 0], sizes = [8, 32], strides = [1, 1]} : vector<8x96xf32> to vector<8x32xf32>
    %252 = arith.mulf %251, %248 : vector<8x32xf32>
    %253 = arith.addf %250, %252 : vector<8x32xf32>
    %254 = vector.extract_strided_slice %246 {offsets = [0, 64], sizes = [8, 32], strides = [1, 1]} : vector<8x96xf32> to vector<8x32xf32>
    %255 = math.tanh %253 : vector<8x32xf32>
    %256 = arith.mulf %254, %255 : vector<8x32xf32>
    %257 = vector.extract_strided_slice %256 {offsets = [0, 0], sizes = [8, 16], strides = [1, 1]} : vector<8x32xf32> to vector<8x16xf32>
    %258 = arith.index_cast %233 : i32 to index
    %c0_73 = arith.constant 0 : index
    %259 = vector.load %arg11[%258, %c0_73] : memref<64x16xf32, #tpu.memory_space<vmem>>, vector<8x16xf32>
    tpu.vector_store %arg11[%258, %c0_73], %257 {strides = array<i32>} : memref<64x16xf32, #tpu.memory_space<vmem>>, vector<8x16xf32>,
    %260 = vector.extract_strided_slice %256 {offsets = [0, 16], sizes = [8, 16], strides = [1, 1]} : vector<8x32xf32> to vector<8x16xf32>
    %261 = arith.index_cast %236 : i32 to index
    %c0_74 = arith.constant 0 : index
    %262 = vector.load %arg12[%261, %c0_74] : memref<64x16xf32, #tpu.memory_space<vmem>>, vector<8x16xf32>
    tpu.vector_store %arg12[%261, %c0_74], %260 {strides = array<i32>} : memref<64x16xf32, #tpu.memory_space<vmem>>, vector<8x16xf32>,
    %c8_i32_75 = arith.constant 8 : i32
    %c0_76 = arith.constant 0 : index
    %c0_77 = arith.constant 0 : index
    %263 = vector.load %arg11[%c0_76, %c0_77] : memref<64x16xf32, #tpu.memory_space<vmem>>, vector<64x16xf32>
    %c0_78 = arith.constant 0 : index
    %c0_79 = arith.constant 0 : index
    %264 = vector.load %arg6[%c0_78, %c0_79] : memref<16x128xf32, #tpu.memory_space<vmem>>, vector<16x128xf32>
    %cst_80 = arith.constant dense<0.000000e+00> : vector<64x128xf32>
    %265 = tpu.matmul %263, %264, %cst_80 {dimension_numbers = #tpu.dot_dimension_numbers<[1], [0], [0], [1], [0, 0, 1, 1], [], []>} : vector<64x16xf32>, vector<16x128xf32>, vector<64x128xf32> -> vector<64x128xf32>
    %c0_81 = arith.constant 0 : index
    %c0_82 = arith.constant 0 : index
    %266 = vector.load %arg12[%c0_81, %c0_82] : memref<64x16xf32, #tpu.memory_space<vmem>>, vector<64x16xf32>
    %c0_83 = arith.constant 0 : index
    %c0_84 = arith.constant 0 : index
    %267 = vector.load %arg7[%c0_83, %c0_84] : memref<16x128xf32, #tpu.memory_space<vmem>>, vector<16x128xf32>
    %cst_85 = arith.constant dense<0.000000e+00> : vector<64x128xf32>
    %268 = tpu.matmul %266, %267, %cst_85 {dimension_numbers = #tpu.dot_dimension_numbers<[1], [0], [0], [1], [0, 0, 1, 1], [], []>} : vector<64x16xf32>, vector<16x128xf32>, vector<64x128xf32> -> vector<64x128xf32>
    %269 = arith.addf %265, %268 : vector<64x128xf32>
    %c0_86 = arith.constant 0 : index
    %c0_87 = arith.constant 0 : index
    %270 = vector.load %arg8[%c0_86, %c0_87] : memref<1x128xf32, #tpu.memory_space<vmem>>, vector<1x128xf32>
    %271 = vector.broadcast %270 : vector<1x128xf32> to vector<64x128xf32>
    %272 = arith.addf %269, %271 : vector<64x128xf32>
    %c0_88 = arith.constant 0 : index
    %c0_89 = arith.constant 0 : index
    %273 = vector.load %arg9[%c0_88, %c0_89] : memref<64x128xf32, #tpu.memory_space<vmem>>, vector<64x128xf32>
    tpu.vector_store %arg9[%c0_88, %c0_89], %272 {strides = array<i32>} : memref<64x128xf32, #tpu.memory_space<vmem>>, vector<64x128xf32>,
    return
  }
  func.func @transform_0(%arg0: i32) -> (i32, i32) {
    %c0_i32 = arith.constant 0 : i32
    %c0_i32_0 = arith.constant 0 : i32
    return %arg0, %c0_i32 : i32, i32
  }
  func.func @transform_1(%arg0: i32) -> (i32, i32) {
    %c0_i32 = arith.constant 0 : i32
    %c0_i32_0 = arith.constant 0 : i32
    %c0_i32_1 = arith.constant 0 : i32
    return %c0_i32, %c0_i32_0 : i32, i32
  }
  func.func @transform_2(%arg0: i32) -> (i32, i32) {
    %c0_i32 = arith.constant 0 : i32
    %c0_i32_0 = arith.constant 0 : i32
    %c0_i32_1 = arith.constant 0 : i32
    return %c0_i32, %c0_i32_0 : i32, i32
  }
  func.func @transform_3(%arg0: i32) -> (i32, i32) {
    %c0_i32 = arith.constant 0 : i32
    %c0_i32_0 = arith.constant 0 : i32
    %c0_i32_1 = arith.constant 0 : i32
    return %c0_i32, %c0_i32_0 : i32, i32
  }
  func.func @transform_4(%arg0: i32) -> (i32, i32) {
    %c0_i32 = arith.constant 0 : i32
    %c0_i32_0 = arith.constant 0 : i32
    %c0_i32_1 = arith.constant 0 : i32
    return %c0_i32, %c0_i32_0 : i32, i32
  }
  func.func @transform_5(%arg0: i32) -> (i32, i32) {
    %c0_i32 = arith.constant 0 : i32
    %c0_i32_0 = arith.constant 0 : i32
    %c0_i32_1 = arith.constant 0 : i32
    return %c0_i32, %c0_i32_0 : i32, i32
  }
  func.func @transform_6(%arg0: i32) -> (i32, i32) {
    %c0_i32 = arith.constant 0 : i32
    %c0_i32_0 = arith.constant 0 : i32
    %c0_i32_1 = arith.constant 0 : i32
    return %c0_i32, %c0_i32_0 : i32, i32
  }
  func.func @transform_7(%arg0: i32) -> (i32, i32) {
    %c0_i32 = arith.constant 0 : i32
    %c0_i32_0 = arith.constant 0 : i32
    %c0_i32_1 = arith.constant 0 : i32
    return %c0_i32, %c0_i32_0 : i32, i32
  }
  func.func @transform_8(%arg0: i32) -> (i32, i32) {
    %c0_i32 = arith.constant 0 : i32
    %c0_i32_0 = arith.constant 0 : i32
    return %arg0, %c0_i32 : i32, i32
  }
}

</mosaic_0001>

<llo_original>
// kernel: tpu_custom_call.1
$region0: #{tpu_custom_call.1}
  #allocation0 [shape = 'u32[]', space=smem, size = 0x4, offset = 0x4, fixed_abs, tag = 'smem constant byte address 0x4 - core index']
  #allocation1 [shape = 'u32[144,128]{1,0:T(1,128)}', space=vmem, size = 0x12000, scoped, tag = 'internal scratch']
  #allocation2 [shape = 'f32[64,128]{1,0:T(8,128)}', space=vmem, size = 0x8000, scoped, tag = 'scratch operand']
  #allocation3 [shape = 'f32[64,16]{1,0:T(8,128)}', space=vmem, size = 0x8000, scoped, tag = 'scratch operand']
  #allocation4 [shape = 'f32[64,16]{1,0:T(8,128)}', space=vmem, size = 0x8000, scoped, tag = 'scratch operand']
  %s0 = inlined_call_operand.hbm [shape: f32[64,64], index: 0, kind: input, shape index: {}]
  %s1 = inlined_call_operand.vmem [shape: f32[2,32], index: 1, kind: input, shape index: {}]
  %s2 = inlined_call_operand.hbm [shape: f32[64,128], index: 2, kind: input, shape index: {}]
  %s3 = inlined_call_operand.hbm [shape: f32[1,128], index: 3, kind: input, shape index: {}]
  %s4 = inlined_call_operand.hbm [shape: f32[32,128], index: 4, kind: input, shape index: {}]
  %s5 = inlined_call_operand.vmem [shape: f32[16,128], index: 5, kind: input, shape index: {}]
  %s6 = inlined_call_operand.hbm [shape: f32[16,128], index: 6, kind: input, shape index: {}]
  %s7 = inlined_call_operand.vmem [shape: f32[1,128], index: 7, kind: input, shape index: {}]
  %s8 = inlined_call_operand.hbm [shape: f32[64,128], index: 8, kind: output, shape index: {}]
  %s9 = sld [smem:[#allocation0]]
  $region62: #{tpu_custom_call.1} parent=0
    _
  %s11 = ssub.s32 1, %s9
  %s12 = scalar_select 0, %s11, %s9
  $region1: #{tpu_custom_call.1} parent=0
    #allocation5 [shape = 'u8[32768]{0}', space=vmem, size = 0x8000, scoped, tag = 'input window, operand 0, single buffered']
    #allocation6 [shape = 's32[1]{0}', space=sflag, size = 0x4, scoped, tag = 'scoped memory for tpu_custom_call.1']
    #allocation7 [shape = 's32[1]{0}', space=sflag, size = 0x4, scoped, tag = 'scoped memory for tpu_custom_call.1']
    #allocation8 [shape = 'u8[32768]{0}', space=vmem, size = 0x8000, scoped, tag = 'input window, operand 2, single buffered']
    #allocation9 [shape = 's32[1]{0}', space=sflag, size = 0x4, scoped, tag = 'scoped memory for tpu_custom_call.1']
    #allocation10 [shape = 'u8[512]{0}', space=vmem, size = 0x400, scoped, tag = 'input window, operand 3, single buffered']
    #allocation11 [shape = 'u8[16384]{0}', space=vmem, size = 0x4000, scoped, tag = 'input window, operand 4, single buffered']
    #allocation12 [shape = 's32[1]{0}', space=sflag, size = 0x4, scoped, tag = 'scoped memory for tpu_custom_call.1']
    #allocation13 [shape = 'u8[8192]{0}', space=vmem, size = 0x2000, scoped, tag = 'input window, operand 6, single buffered']
    #allocation14 [shape = 'u8[32768]{0}', space=vmem, size = 0x8000, scoped, tag = 'output window, operand 0, single buffered']
    %13 = vsyncpa [#allocation6], 0
    %14 = vsyncpa [#allocation9], 0
    %15 = vsyncpa [#allocation12], 0
    %16 = vsyncpa [#allocation7], 0
    // Predicated region
    $region2: #{tpu_custom_call.1} parent=1 // pred_check
      _
    $region3: #{tpu_custom_call.1} parent=1 // pred_check_branch
      %18 = sbr.rel (0) target = $region5
    $region4: #{tpu_custom_call.1} parent=1 // pred_region
      %s20 = ssub.s32 1024, 1024
      %21 = vsyncadd [#allocation6], %s20
      %s22 = sshll.u32 [#allocation5], 4
      %s23 = int_to_ptr.vmem [resolvable:$true] %s22
      %28 = dma.hbm_to_vmem [thread:$0]  %s0, 1024, %s23, [#allocation6], 128, 128, 8
    $region5: #{tpu_custom_call.1} parent=1 // pred_fallthru
      _
    // Predicated region
    $region6: #{tpu_custom_call.1} parent=1 // pred_check
      _
    $region7: #{tpu_custom_call.1} parent=1 // pred_check_branch
      %30 = sbr.rel (0) target = $region9
    $region8: #{tpu_custom_call.1} parent=1 // pred_region
      _
    $region9: #{tpu_custom_call.1} parent=1 // pred_fallthru
      _
    // Predicated region
    $region10: #{tpu_custom_call.1} parent=1 // pred_check
      _
    $region11: #{tpu_custom_call.1} parent=1 // pred_check_branch
      %32 = sbr.rel (0) target = $region13
    $region12: #{tpu_custom_call.1} parent=1 // pred_region
      %s34 = ssub.s32 1024, 1024
      %35 = vsyncadd [#allocation9], %s34
      %s36 = sshll.u32 [#allocation8], 4
      %s37 = int_to_ptr.vmem [resolvable:$true] %s36
      %42 = dma.hbm_to_vmem [thread:$0]  %s2, 1024, %s37, [#allocation9], 128, 128, 8
    $region13: #{tpu_custom_call.1} parent=1 // pred_fallthru
      _
    // Predicated region
    $region14: #{tpu_custom_call.1} parent=1 // pred_check
      _
    $region15: #{tpu_custom_call.1} parent=1 // pred_check_branch
      %44 = sbr.rel (0) target = $region17
    $region16: #{tpu_custom_call.1} parent=1 // pred_region
      %s46 = ssub.s32 16, 16
      %47 = vsyncadd [#allocation9], %s46
      %s49 = sshll.u32 [#allocation10], 4
      %s50 = int_to_ptr.vmem [resolvable:$true] %s49
      %52 = dma.hbm_to_vmem [thread:$0]  %s3, 16, %s50, [#allocation9]
    $region17: #{tpu_custom_call.1} parent=1 // pred_fallthru
      _
    // Predicated region
    $region18: #{tpu_custom_call.1} parent=1 // pred_check
      _
    $region19: #{tpu_custom_call.1} parent=1 // pred_check_branch
      %54 = sbr.rel (0) target = $region21
    $region20: #{tpu_custom_call.1} parent=1 // pred_region
      %s56 = ssub.s32 512, 512
      %57 = vsyncadd [#allocation12], %s56
      %s58 = sshll.u32 [#allocation11], 4
      %s59 = int_to_ptr.vmem [resolvable:$true] %s58
      %64 = dma.hbm_to_vmem [thread:$0]  %s4, 512, %s59, [#allocation12], 128, 128, 8
    $region21: #{tpu_custom_call.1} parent=1 // pred_fallthru
      _
    // Predicated region
    $region22: #{tpu_custom_call.1} parent=1 // pred_check
      _
    $region23: #{tpu_custom_call.1} parent=1 // pred_check_branch
      %66 = sbr.rel (0) target = $region25
    $region24: #{tpu_custom_call.1} parent=1 // pred_region
      _
    $region25: #{tpu_custom_call.1} parent=1 // pred_fallthru
      _
    // Predicated region
    $region26: #{tpu_custom_call.1} parent=1 // pred_check
      _
    $region27: #{tpu_custom_call.1} parent=1 // pred_check_branch
      %68 = sbr.rel (0) target = $region29
    $region28: #{tpu_custom_call.1} parent=1 // pred_region
      %s70 = ssub.s32 256, 256
      %71 = vsyncadd [#allocation12], %s70
      %s72 = sshll.u32 [#allocation13], 4
      %s73 = int_to_ptr.vmem [resolvable:$true] %s72
      %78 = dma.hbm_to_vmem [thread:$0]  %s6, 256, %s73, [#allocation12], 128, 128, 8
    $region29: #{tpu_custom_call.1} parent=1 // pred_fallthru
      _
    // Predicated region
    $region30: #{tpu_custom_call.1} parent=1 // pred_check
      _
    $region31: #{tpu_custom_call.1} parent=1 // pred_check_branch
      %80 = sbr.rel (0) target = $region33
    $region32: #{tpu_custom_call.1} parent=1 // pred_region
      _
    $region33: #{tpu_custom_call.1} parent=1 // pred_fallthru
      _
    // Predicated region
    $region34: #{tpu_custom_call.1} parent=1 // pred_check
      _
    $region35: #{tpu_custom_call.1} parent=1 // pred_check_branch
      %82 = sbr.rel (0) target = $region37
    $region36: #{tpu_custom_call.1} parent=1 // pred_region
      %83 = dma.done [#allocation6], 1024
    $region37: #{tpu_custom_call.1} parent=1 // pred_fallthru
      _
    // Predicated region
    $region38: #{tpu_custom_call.1} parent=1 // pred_check
      _
    $region39: #{tpu_custom_call.1} parent=1 // pred_check_branch
      %85 = sbr.rel (0) target = $region41
    $region40: #{tpu_custom_call.1} parent=1 // pred_region
      %86 = dma.done [#allocation9], 1024
    $region41: #{tpu_custom_call.1} parent=1 // pred_fallthru
      _
    // Predicated region
    $region42: #{tpu_custom_call.1} parent=1 // pred_check
      _
    $region43: #{tpu_custom_call.1} parent=1 // pred_check_branch
      %88 = sbr.rel (0) target = $region45
    $region44: #{tpu_custom_call.1} parent=1 // pred_region
      %89 = dma.done [#allocation9], 16
    $region45: #{tpu_custom_call.1} parent=1 // pred_fallthru
      _
    // Predicated region
    $region46: #{tpu_custom_call.1} parent=1 // pred_check
      _
    $region47: #{tpu_custom_call.1} parent=1 // pred_check_branch
      %91 = sbr.rel (0) target = $region49
    $region48: #{tpu_custom_call.1} parent=1 // pred_region
      %92 = dma.done [#allocation12], 512
    $region49: #{tpu_custom_call.1} parent=1 // pred_fallthru
      _
    // Predicated region
    $region50: #{tpu_custom_call.1} parent=1 // pred_check
      _
    $region51: #{tpu_custom_call.1} parent=1 // pred_check_branch
      %94 = sbr.rel (0) target = $region53
    $region52: #{tpu_custom_call.1} parent=1 // pred_region
      %95 = dma.done [#allocation12], 256
    $region53: #{tpu_custom_call.1} parent=1 // pred_fallthru
      _
    %v96 = vld [vmem:[#allocation5] sm:$0xff]
    %v97 = vld [vmem:[#allocation5 + $0x8] sm:$0xff]
    %v98 = vld [vmem:[#allocation5 + $0x10] sm:$0xff]
    %v99 = vld [vmem:[#allocation5 + $0x18] sm:$0xff]
    %v100 = vld [vmem:[#allocation5 + $0x20] sm:$0xff]
    %v101 = vld [vmem:[#allocation5 + $0x28] sm:$0xff]
    %v102 = vld [vmem:[#allocation5 + $0x30] sm:$0xff]
    %v103 = vld [vmem:[#allocation5 + $0x38] sm:$0xff]
    %v104 = vld [vmem:[#allocation8] sm:$0xff]
    %v105 = vld [vmem:[#allocation8 + $0x8] sm:$0xff]
    %v106 = vld [vmem:[#allocation8 + $0x10] sm:$0xff]
    %v107 = vld [vmem:[#allocation8 + $0x18] sm:$0xff]
    %v108 = vld [vmem:[#allocation8 + $0x20] sm:$0xff]
    %v109 = vld [vmem:[#allocation8 + $0x28] sm:$0xff]
    %v110 = vld [vmem:[#allocation8 + $0x30] sm:$0xff]
    %v111 = vld [vmem:[#allocation8 + $0x38] sm:$0xff]
    %v112 = vld [vmem:[#allocation10] sm:$0x1]
    %v114 = vlaneseq
    %v115 = vshrl.u32 %v114, 7
    %v116 = vsub.s32 0, %v115
    %v117 = vrot.slane %v112, %v116
    %vm119 = vcmask 523264
    %v121 = vsel %vm119, %v96, 0
    %v124 = vsel %vm119, %v97, 0
    %v127 = vsel %vm119, %v98, 0
    %v130 = vsel %vm119, %v99, 0
    %v133 = vsel %vm119, %v100, 0
    %v136 = vsel %vm119, %v101, 0
    %v139 = vsel %vm119, %v102, 0
    %v142 = vsel %vm119, %v103, 0
    %144 = vmatprep.subr.mxu0 0.0
    %145 = vmatpush1.msra.mxu0 %v104
    %146 = vmatprep.subr.mxu0 0.0
    %147 = vmatpush1.msra.mxu0 %v105
    %148 = vmatprep.subr.mxu0 0.0
    %149 = vmatpush1.msra.mxu0 %v106
    %150 = vmatprep.subr.mxu0 0.0
    %151 = vmatpush1.msra.mxu0 %v107
    %152 = vmatprep.subr.mxu0 0.0
    %153 = vmatpush1.msra.mxu0 %v108
    %154 = vmatprep.subr.mxu0 0.0
    %155 = vmatpush1.msra.mxu0 %v109
    %156 = vmatprep.subr.mxu0 0.0
    %157 = vmatpush1.msra.mxu0 %v110
    %158 = vmatprep.subr.mxu0 0.0
    %159 = vmatpush1.msra.mxu0 %v111
    %160 = vmatprep.subr.mxu0 0.0
    %161 = vmatpush1.msra.mxu0 0.0
    %162 = vmatprep.subr.mxu0 0.0
    %163 = vmatpush1.msra.mxu0 0.0
    %164 = vmatprep.subr.mxu0 0.0
    %165 = vmatpush1.msra.mxu0 0.0
    %166 = vmatprep.subr.mxu0 0.0
    %167 = vmatpush1.msra.mxu0 0.0
    %168 = vmatprep.subr.mxu0 0.0
    %169 = vmatpush1.msra.mxu0 0.0
    %170 = vmatprep.subr.mxu0 0.0
    %171 = vmatpush1.msra.mxu0 0.0
    %172 = vmatprep.subr.mxu0 0.0
    %173 = vmatpush1.msra.mxu0 0.0
    %174 = vmatprep.subr.mxu0 0.0
    %175 = vmatpush1.msra.mxu0 0.0
    %176 = vmatprep.subr.mxu0 0.0
    %177 = vmatpush1.msra.mxu0 0.0
    %178 = vmatprep.subr.mxu0 0.0
    %179 = vmatpush1.msra.mxu0 0.0
    %180 = vmatprep.subr.mxu0 0.0
    %181 = vmatpush1.msra.mxu0 0.0
    %182 = vmatprep.subr.mxu0 0.0
    %183 = vmatpush1.msra.mxu0 0.0
    %184 = vmatprep.subr.mxu0 0.0
    %185 = vmatpush1.msra.mxu0 0.0
    %186 = vmatprep.subr.mxu0 0.0
    %187 = vmatpush1.msra.mxu0 0.0
    %188 = vmatprep.subr.mxu0 0.0
    %189 = vmatpush1.msra.mxu0 0.0
    %190 = vmatprep.subr.mxu0 0.0
    %191 = vmatpush1.msra.mxu0 0.0
    %192 = vmatprep.subr.mxu0 0.0
    %193 = vmatpush1.msra.mxu0 0.0
    %194 = vmatprep.subr.mxu0 0.0
    %195 = vmatpush1.msra.mxu0 0.0
    %196 = vmatprep.subr.mxu0 0.0
    %197 = vmatpush1.msra.mxu0 0.0
    %198 = vmatprep.subr.mxu0 0.0
    %199 = vmatpush1.msra.mxu0 0.0
    %200 = vmatprep.subr.mxu0 0.0
    %201 = vmatpush1.msra.mxu0 0.0
    %202 = vmatprep.subr.mxu0 0.0
    %203 = vmatpush1.msra.mxu0 0.0
    %204 = vmatprep.subr.mxu0 0.0
    %205 = vmatpush1.msra.mxu0 0.0
    %206 = vmatprep.subr.mxu0 0.0
    %207 = vmatpush1.msra.mxu0 0.0
    %208 = vmatprep.mubr.f32.mxu0 0.0
    %209 = vmatmul.mubr.f32.gmra.mrb[0].mxu0 %v121
    %v210 = vpop.f32.mrb[0].mxu0
    %v211 = vadd.f32 %v117, %v210
    %v212 = vpop.f32.mrb[0].mxu0
    %213 = vmatprep.mubr.f32.mxu0 0.0
    %214 = vmatmul.mubr.f32.gmra.mrb[0].mxu0 %v124
    %v215 = vpop.f32.mrb[0].mxu0
    %v216 = vadd.f32 %v117, %v215
    %v217 = vpop.f32.mrb[0].mxu0
    %218 = vmatprep.mubr.f32.mxu0 0.0
    %219 = vmatmul.mubr.f32.gmra.mrb[0].mxu0 %v127
    %v220 = vpop.f32.mrb[0].mxu0
    %v221 = vadd.f32 %v117, %v220
    %v222 = vpop.f32.mrb[0].mxu0
    %223 = vmatprep.mubr.f32.mxu0 0.0
    %224 = vmatmul.mubr.f32.gmra.mrb[0].mxu0 %v130
    %v225 = vpop.f32.mrb[0].mxu0
    %v226 = vadd.f32 %v117, %v225
    %v227 = vpop.f32.mrb[0].mxu0
    %228 = vmatprep.mubr.f32.mxu0 0.0
    %229 = vmatmul.mubr.f32.gmra.mrb[0].mxu0 %v133
    %v230 = vpop.f32.mrb[0].mxu0
    %v231 = vadd.f32 %v117, %v230
    %v232 = vpop.f32.mrb[0].mxu0
    %233 = vmatprep.mubr.f32.mxu0 0.0
    %234 = vmatmul.mubr.f32.gmra.mrb[0].mxu0 %v136
    %v235 = vpop.f32.mrb[0].mxu0
    %v236 = vadd.f32 %v117, %v235
    %v237 = vpop.f32.mrb[0].mxu0
    %238 = vmatprep.mubr.f32.mxu0 0.0
    %239 = vmatmul.mubr.f32.gmra.mrb[0].mxu0 %v139
    %v240 = vpop.f32.mrb[0].mxu0
    %v241 = vadd.f32 %v117, %v240
    %v242 = vpop.f32.mrb[0].mxu0
    %243 = vmatprep.mubr.f32.mxu0 0.0
    %244 = vmatmul.mubr.f32.gmra.mrb[0].mxu0 %v142
    %v245 = vpop.f32.mrb[0].mxu0
    %v246 = vadd.f32 %v117, %v245
    %v247 = vpop.f32.mrb[0].mxu0
    %248 = vdwg.mxu0
    %249 = vst [vmem:[#allocation2] sm:$0xff] %v211
    %250 = vst [vmem:[#allocation2 + $0x8] sm:$0xff] %v216
    %251 = vst [vmem:[#allocation2 + $0x10] sm:$0xff] %v221
    %252 = vst [vmem:[#allocation2 + $0x18] sm:$0xff] %v226
    %253 = vst [vmem:[#allocation2 + $0x20] sm:$0xff] %v231
    %254 = vst [vmem:[#allocation2 + $0x28] sm:$0xff] %v236
    %255 = vst [vmem:[#allocation2 + $0x30] sm:$0xff] %v241
    %256 = vst [vmem:[#allocation2 + $0x38] sm:$0xff] %v246
    %v257 = vld [vmem:[#allocation11] sm:$0xff]
    %v258 = vld [vmem:[#allocation11 + $0x8] sm:$0xff]
    %v259 = vld [vmem:[#allocation11 + $0x10] sm:$0xff]
    %v260 = vld [vmem:[#allocation11 + $0x18] sm:$0xff]
    %v261 = vld [vmem:[%s1] sm:$0x1]
    %v262 = vtanh.pop %v261
    %v263 = vlaneseq
    %v264 = vshrl.u32 %v263, 7
    %v265 = vsub.s32 0, %v264
    %v266 = vrot.slane %v262, %v265
    %v267 = vld [vmem:[%s1 + $0x1] sm:$0x1]
    %v268 = vlaneseq
    %v269 = vshrl.u32 %v268, 7
    %v270 = vsub.s32 0, %v269
    %v271 = vrot.slane %v267, %v270
    %v272 = vld [vmem:[#allocation2] sm:$0xff]
    %vm273 = vcmask 261120
    %v275 = vsel %vm273, %v266, 0
    %277 = vmatprep.subr.mxu0 0.0
    %278 = vmatpush1.msra.mxu0 %v257
    %279 = vmatprep.subr.mxu0 0.0
    %280 = vmatpush1.msra.mxu0 %v258
    %281 = vmatprep.subr.mxu0 0.0
    %282 = vmatpush1.msra.mxu0 %v259
    %283 = vmatprep.subr.mxu0 0.0
    %284 = vmatpush1.msra.mxu0 %v260
    %285 = vmatprep.subr.mxu0 0.0
    %286 = vmatpush1.msra.mxu0 0.0
    %287 = vmatprep.subr.mxu0 0.0
    %288 = vmatpush1.msra.mxu0 0.0
    %289 = vmatprep.subr.mxu0 0.0
    %290 = vmatpush1.msra.mxu0 0.0
    %291 = vmatprep.subr.mxu0 0.0
    %292 = vmatpush1.msra.mxu0 0.0
    %293 = vmatprep.subr.mxu0 0.0
    %294 = vmatpush1.msra.mxu0 0.0
    %295 = vmatprep.subr.mxu0 0.0
    %296 = vmatpush1.msra.mxu0 0.0
    %297 = vmatprep.subr.mxu0 0.0
    %298 = vmatpush1.msra.mxu0 0.0
    %299 = vmatprep.subr.mxu0 0.0
    %300 = vmatpush1.msra.mxu0 0.0
    %301 = vmatprep.subr.mxu0 0.0
    %302 = vmatpush1.msra.mxu0 0.0
    %303 = vmatprep.subr.mxu0 0.0
    %304 = vmatpush1.msra.mxu0 0.0
    %305 = vmatprep.subr.mxu0 0.0
    %306 = vmatpush1.msra.mxu0 0.0
    %307 = vmatprep.subr.mxu0 0.0
    %308 = vmatpush1.msra.mxu0 0.0
    %309 = vmatprep.subr.mxu0 0.0
    %310 = vmatpush1.msra.mxu0 0.0
    %311 = vmatprep.subr.mxu0 0.0
    %312 = vmatpush1.msra.mxu0 0.0
    %313 = vmatprep.subr.mxu0 0.0
    %314 = vmatpush1.msra.mxu0 0.0
    %315 = vmatprep.subr.mxu0 0.0
    %316 = vmatpush1.msra.mxu0 0.0
    %317 = vmatprep.subr.mxu0 0.0
    %318 = vmatpush1.msra.mxu0 0.0
    %319 = vmatprep.subr.mxu0 0.0
    %320 = vmatpush1.msra.mxu0 0.0
    %321 = vmatprep.subr.mxu0 0.0
    %322 = vmatpush1.msra.mxu0 0.0
    %323 = vmatprep.subr.mxu0 0.0
    %324 = vmatpush1.msra.mxu0 0.0
    %325 = vmatprep.subr.mxu0 0.0
    %326 = vmatpush1.msra.mxu0 0.0
    %327 = vmatprep.subr.mxu0 0.0
    %328 = vmatpush1.msra.mxu0 0.0
    %329 = vmatprep.subr.mxu0 0.0
    %330 = vmatpush1.msra.mxu0 0.0
    %331 = vmatprep.subr.mxu0 0.0
    %332 = vmatpush1.msra.mxu0 0.0
    %333 = vmatprep.subr.mxu0 0.0
    %334 = vmatpush1.msra.mxu0 0.0
    %335 = vmatprep.subr.mxu0 0.0
    %336 = vmatpush1.msra.mxu0 0.0
    %337 = vmatprep.subr.mxu0 0.0
    %338 = vmatpush1.msra.mxu0 0.0
    %339 = vmatprep.subr.mxu0 0.0
    %340 = vmatpush1.msra.mxu0 0.0
    %341 = vmatprep.mubr.f32.mxu0 0.0
    %342 = vmatmul.mubr.f32.gmra.mrb[0].mxu0 %v275
    %v343 = vpop.f32.mrb[0].mxu0
    %v344 = vadd.f32 0.0, %v343
    %v345 = vpop.f32.mrb[0].mxu0
    %346 = vdwg.mxu0
    %v347 = vadd.f32 %v272, %v344
    %v348 = vxor.u32 %v347, 2147483648
    %v349 = vmul.f32 %v348, 1.442695
    %v350 = vpow.pop %v349
    %v351 = vadd.f32 %v350, 1.0
    %v352 = vrcp.pop %v351
    %v353 = vmul.f32 1.0, %v352
    %v354 = vtanh.pop %v347
    %356 = vrot.lane.b32.xlu0 %v271, 32
    %v357 = vpop.permute.xlu0 %356
    %v359 = vmul.f32 %v353, %v357
    %361 = vrot.lane.b32.xlu0 %v354, 32
    %v362 = vpop.permute.xlu0 %361
    %v364 = vmul.f32 %v353, %v362
    %366 = vrot.lane.b32.xlu0 %v364, 32
    %v367 = vpop.permute.xlu0 %366
    %v369 = vadd.f32 %v359, %v367
    %v370 = vtanh.pop %v369
    %372 = vrot.lane.b32.xlu0 %v370, 32
    %v373 = vpop.permute.xlu0 %372
    %v375 = vmul.f32 %v353, %v373
    %377 = vrot.lane.b32.xlu0 %v375, 64
    %v378 = vpop.permute.xlu0 %377
    %vm380 = vcmask 130048
    %381 = vst.msk [vmem:[#allocation3] sm:$0xff] %vm380, %v378
    %382 = vrot.lane.b32.xlu0 %v375, 48
    %v383 = vpop.permute.xlu0 %382
    %s385 = scalar_lea.vmem [#allocation4], 56
    %386 = vst.msk [vmem:[%s385] sm:$0xff] %vm380, %v383
    %s387 = scalar_lea.vmem [#allocation2], 8
    %v388 = vld [vmem:[%s387] sm:$0xff]
    %v389 = vsel %vm273, %v378, 0
    %391 = vmatprep.subr.mxu0 0.0
    %392 = vmatpush1.msra.mxu0 %v257
    %393 = vmatprep.subr.mxu0 0.0
    %394 = vmatpush1.msra.mxu0 %v258
    %395 = vmatprep.subr.mxu0 0.0
    %396 = vmatpush1.msra.mxu0 %v259
    %397 = vmatprep.subr.mxu0 0.0
    %398 = vmatpush1.msra.mxu0 %v260
    %399 = vmatprep.subr.mxu0 0.0
    %400 = vmatpush1.msra.mxu0 0.0
    %401 = vmatprep.subr.mxu0 0.0
    %402 = vmatpush1.msra.mxu0 0.0
    %403 = vmatprep.subr.mxu0 0.0
    %404 = vmatpush1.msra.mxu0 0.0
    %405 = vmatprep.subr.mxu0 0.0
    %406 = vmatpush1.msra.mxu0 0.0
    %407 = vmatprep.subr.mxu0 0.0
    %408 = vmatpush1.msra.mxu0 0.0
    %409 = vmatprep.subr.mxu0 0.0
    %410 = vmatpush1.msra.mxu0 0.0
    %411 = vmatprep.subr.mxu0 0.0
    %412 = vmatpush1.msra.mxu0 0.0
    %413 = vmatprep.subr.mxu0 0.0
    %414 = vmatpush1.msra.mxu0 0.0
    %415 = vmatprep.subr.mxu0 0.0
    %416 = vmatpush1.msra.mxu0 0.0
    %417 = vmatprep.subr.mxu0 0.0
    %418 = vmatpush1.msra.mxu0 0.0
    %419 = vmatprep.subr.mxu0 0.0
    %420 = vmatpush1.msra.mxu0 0.0
    %421 = vmatprep.subr.mxu0 0.0
    %422 = vmatpush1.msra.mxu0 0.0
    %423 = vmatprep.subr.mxu0 0.0
    %424 = vmatpush1.msra.mxu0 0.0
    %425 = vmatprep.subr.mxu0 0.0
    %426 = vmatpush1.msra.mxu0 0.0
    %427 = vmatprep.subr.mxu0 0.0
    %428 = vmatpush1.msra.mxu0 0.0
    %429 = vmatprep.subr.mxu0 0.0
    %430 = vmatpush1.msra.mxu0 0.0
    %431 = vmatprep.subr.mxu0 0.0
    %432 = vmatpush1.msra.mxu0 0.0
    %433 = vmatprep.subr.mxu0 0.0
    %434 = vmatpush1.msra.mxu0 0.0
    %435 = vmatprep.subr.mxu0 0.0
    %436 = vmatpush1.msra.mxu0 0.0
    %437 = vmatprep.subr.mxu0 0.0
    %438 = vmatpush1.msra.mxu0 0.0
    %439 = vmatprep.subr.mxu0 0.0
    %440 = vmatpush1.msra.mxu0 0.0
    %441 = vmatprep.subr.mxu0 0.0
    %442 = vmatpush1.msra.mxu0 0.0
    %443 = vmatprep.subr.mxu0 0.0
    %444 = vmatpush1.msra.mxu0 0.0
    %445 = vmatprep.subr.mxu0 0.0
    %446 = vmatpush1.msra.mxu0 0.0
    %447 = vmatprep.subr.mxu0 0.0
    %448 = vmatpush1.msra.mxu0 0.0
    %449 = vmatprep.subr.mxu0 0.0
    %450 = vmatpush1.msra.mxu0 0.0
    %451 = vmatprep.subr.mxu0 0.0
    %452 = vmatpush1.msra.mxu0 0.0
    %453 = vmatprep.subr.mxu0 0.0
    %454 = vmatpush1.msra.mxu0 0.0
    %455 = vmatprep.mubr.f32.mxu0 0.0
    %456 = vmatmul.mubr.f32.gmra.mrb[0].mxu0 %v389
    %v457 = vpop.f32.mrb[0].mxu0
    %v458 = vadd.f32 0.0, %v457
    %v459 = vpop.f32.mrb[0].mxu0
    %460 = vdwg.mxu0
    %v461 = vadd.f32 %v388, %v458
    %v462 = vxor.u32 %v461, 2147483648
    %v463 = vmul.f32 %v462, 1.442695
    %v464 = vpow.pop %v463
    %v465 = vadd.f32 %v464, 1.0
    %v466 = vrcp.pop %v465
    %v467 = vmul.f32 1.0, %v466
    %v468 = vtanh.pop %v461
    %v469 = vmul.f32 %v467, %v369
    %471 = vrot.lane.b32.xlu0 %v468, 32
    %v472 = vpop.permute.xlu0 %471
    %v474 = vmul.f32 %v467, %v472
    %476 = vrot.lane.b32.xlu0 %v474, 32
    %v477 = vpop.permute.xlu0 %476
    %v479 = vadd.f32 %v469, %v477
    %v480 = vtanh.pop %v479
    %482 = vrot.lane.b32.xlu0 %v480, 32
    %v483 = vpop.permute.xlu0 %482
    %v485 = vmul.f32 %v467, %v483
    %487 = vrot.lane.b32.xlu0 %v485, 64
    %v488 = vpop.permute.xlu0 %487
    %s490 = scalar_lea.vmem [#allocation3], 8
    %491 = vst.msk [vmem:[%s490] sm:$0xff] %vm380, %v488
    %492 = vrot.lane.b32.xlu0 %v485, 48
    %v493 = vpop.permute.xlu0 %492
    %s495 = scalar_lea.vmem [#allocation4], 48
    %496 = vst.msk [vmem:[%s495] sm:$0xff] %vm380, %v493
    %s497 = scalar_lea.vmem [#allocation2], 16
    %v498 = vld [vmem:[%s497] sm:$0xff]
    %v499 = vsel %vm273, %v488, 0
    %501 = vmatprep.subr.mxu0 0.0
    %502 = vmatpush1.msra.mxu0 %v257
    %503 = vmatprep.subr.mxu0 0.0
    %504 = vmatpush1.msra.mxu0 %v258
    %505 = vmatprep.subr.mxu0 0.0
    %506 = vmatpush1.msra.mxu0 %v259
    %507 = vmatprep.subr.mxu0 0.0
    %508 = vmatpush1.msra.mxu0 %v260
    %509 = vmatprep.subr.mxu0 0.0
    %510 = vmatpush1.msra.mxu0 0.0
    %511 = vmatprep.subr.mxu0 0.0
    %512 = vmatpush1.msra.mxu0 0.0
    %513 = vmatprep.subr.mxu0 0.0
    %514 = vmatpush1.msra.mxu0 0.0
    %515 = vmatprep.subr.mxu0 0.0
    %516 = vmatpush1.msra.mxu0 0.0
    %517 = vmatprep.subr.mxu0 0.0
    %518 = vmatpush1.msra.mxu0 0.0
    %519 = vmatprep.subr.mxu0 0.0
    %520 = vmatpush1.msra.mxu0 0.0
    %521 = vmatprep.subr.mxu0 0.0
    %522 = vmatpush1.msra.mxu0 0.0
    %523 = vmatprep.subr.mxu0 0.0
    %524 = vmatpush1.msra.mxu0 0.0
    %525 = vmatprep.subr.mxu0 0.0
    %526 = vmatpush1.msra.mxu0 0.0
    %527 = vmatprep.subr.mxu0 0.0
    %528 = vmatpush1.msra.mxu0 0.0
    %529 = vmatprep.subr.mxu0 0.0
    %530 = vmatpush1.msra.mxu0 0.0
    %531 = vmatprep.subr.mxu0 0.0
    %532 = vmatpush1.msra.mxu0 0.0
    %533 = vmatprep.subr.mxu0 0.0
    %534 = vmatpush1.msra.mxu0 0.0
    %535 = vmatprep.subr.mxu0 0.0
    %536 = vmatpush1.msra.mxu0 0.0
    %537 = vmatprep.subr.mxu0 0.0
    %538 = vmatpush1.msra.mxu0 0.0
    %539 = vmatprep.subr.mxu0 0.0
    %540 = vmatpush1.msra.mxu0 0.0
    %541 = vmatprep.subr.mxu0 0.0
    %542 = vmatpush1.msra.mxu0 0.0
    %543 = vmatprep.subr.mxu0 0.0
    %544 = vmatpush1.msra.mxu0 0.0
    %545 = vmatprep.subr.mxu0 0.0
    %546 = vmatpush1.msra.mxu0 0.0
    %547 = vmatprep.subr.mxu0 0.0
    %548 = vmatpush1.msra.mxu0 0.0
    %549 = vmatprep.subr.mxu0 0.0
    %550 = vmatpush1.msra.mxu0 0.0
    %551 = vmatprep.subr.mxu0 0.0
    %552 = vmatpush1.msra.mxu0 0.0
    %553 = vmatprep.subr.mxu0 0.0
    %554 = vmatpush1.msra.mxu0 0.0
    %555 = vmatprep.subr.mxu0 0.0
    %556 = vmatpush1.msra.mxu0 0.0
    %557 = vmatprep.subr.mxu0 0.0
    %558 = vmatpush1.msra.mxu0 0.0
    %559 = vmatprep.subr.mxu0 0.0
    %560 = vmatpush1.msra.mxu0 0.0
    %561 = vmatprep.subr.mxu0 0.0
    %562 = vmatpush1.msra.mxu0 0.0
    %563 = vmatprep.subr.mxu0 0.0
    %564 = vmatpush1.msra.mxu0 0.0
    %565 = vmatprep.mubr.f32.mxu0 0.0
    %566 = vmatmul.mubr.f32.gmra.mrb[0].mxu0 %v499
    %v567 = vpop.f32.mrb[0].mxu0
    %v568 = vadd.f32 0.0, %v567
    %v569 = vpop.f32.mrb[0].mxu0
    %570 = vdwg.mxu0
    %v571 = vadd.f32 %v498, %v568
    %v572 = vxor.u32 %v571, 2147483648
    %v573 = vmul.f32 %v572, 1.442695
    %v574 = vpow.pop %v573
    %v575 = vadd.f32 %v574, 1.0
    %v576 = vrcp.pop %v575
    %v577 = vmul.f32 1.0, %v576
    %v578 = vtanh.pop %v571
    %v579 = vmul.f32 %v577, %v479
    %581 = vrot.lane.b32.xlu0 %v578, 32
    %v582 = vpop.permute.xlu0 %581
    %v584 = vmul.f32 %v577, %v582
    %586 = vrot.lane.b32.xlu0 %v584, 32
    %v587 = vpop.permute.xlu0 %586
    %v589 = vadd.f32 %v579, %v587
    %v590 = vtanh.pop %v589
    %592 = vrot.lane.b32.xlu0 %v590, 32
    %v593 = vpop.permute.xlu0 %592
    %v595 = vmul.f32 %v577, %v593
    %597 = vrot.lane.b32.xlu0 %v595, 64
    %v598 = vpop.permute.xlu0 %597
    %s600 = scalar_lea.vmem [#allocation3], 16
    %601 = vst.msk [vmem:[%s600] sm:$0xff] %vm380, %v598
    %602 = vrot.lane.b32.xlu0 %v595, 48
    %v603 = vpop.permute.xlu0 %602
    %s605 = scalar_lea.vmem [#allocation4], 40
    %606 = vst.msk [vmem:[%s605] sm:$0xff] %vm380, %v603
    %s607 = scalar_lea.vmem [#allocation2], 24
    %v608 = vld [vmem:[%s607] sm:$0xff]
    %v609 = vsel %vm273, %v598, 0
    %611 = vmatprep.subr.mxu0 0.0
    %612 = vmatpush1.msra.mxu0 %v257
    %613 = vmatprep.subr.mxu0 0.0
    %614 = vmatpush1.msra.mxu0 %v258
    %615 = vmatprep.subr.mxu0 0.0
    %616 = vmatpush1.msra.mxu0 %v259
    %617 = vmatprep.subr.mxu0 0.0
    %618 = vmatpush1.msra.mxu0 %v260
    %619 = vmatprep.subr.mxu0 0.0
    %620 = vmatpush1.msra.mxu0 0.0
    %621 = vmatprep.subr.mxu0 0.0
    %622 = vmatpush1.msra.mxu0 0.0
    %623 = vmatprep.subr.mxu0 0.0
    %624 = vmatpush1.msra.mxu0 0.0
    %625 = vmatprep.subr.mxu0 0.0
    %626 = vmatpush1.msra.mxu0 0.0
    %627 = vmatprep.subr.mxu0 0.0
    %628 = vmatpush1.msra.mxu0 0.0
    %629 = vmatprep.subr.mxu0 0.0
    %630 = vmatpush1.msra.mxu0 0.0
    %631 = vmatprep.subr.mxu0 0.0
    %632 = vmatpush1.msra.mxu0 0.0
    %633 = vmatprep.subr.mxu0 0.0
    %634 = vmatpush1.msra.mxu0 0.0
    %635 = vmatprep.subr.mxu0 0.0
    %636 = vmatpush1.msra.mxu0 0.0
    %637 = vmatprep.subr.mxu0 0.0
    %638 = vmatpush1.msra.mxu0 0.0
    %639 = vmatprep.subr.mxu0 0.0
    %640 = vmatpush1.msra.mxu0 0.0
    %641 = vmatprep.subr.mxu0 0.0
    %642 = vmatpush1.msra.mxu0 0.0
    %643 = vmatprep.subr.mxu0 0.0
    %644 = vmatpush1.msra.mxu0 0.0
    %645 = vmatprep.subr.mxu0 0.0
    %646 = vmatpush1.msra.mxu0 0.0
    %647 = vmatprep.subr.mxu0 0.0
    %648 = vmatpush1.msra.mxu0 0.0
    %649 = vmatprep.subr.mxu0 0.0
    %650 = vmatpush1.msra.mxu0 0.0
    %651 = vmatprep.subr.mxu0 0.0
    %652 = vmatpush1.msra.mxu0 0.0
    %653 = vmatprep.subr.mxu0 0.0
    %654 = vmatpush1.msra.mxu0 0.0
    %655 = vmatprep.subr.mxu0 0.0
    %656 = vmatpush1.msra.mxu0 0.0
    %657 = vmatprep.subr.mxu0 0.0
    %658 = vmatpush1.msra.mxu0 0.0
    %659 = vmatprep.subr.mxu0 0.0
    %660 = vmatpush1.msra.mxu0 0.0
    %661 = vmatprep.subr.mxu0 0.0
    %662 = vmatpush1.msra.mxu0 0.0
    %663 = vmatprep.subr.mxu0 0.0
    %664 = vmatpush1.msra.mxu0 0.0
    %665 = vmatprep.subr.mxu0 0.0
    %666 = vmatpush1.msra.mxu0 0.0
    %667 = vmatprep.subr.mxu0 0.0
    %668 = vmatpush1.msra.mxu0 0.0
    %669 = vmatprep.subr.mxu0 0.0
    %670 = vmatpush1.msra.mxu0 0.0
    %671 = vmatprep.subr.mxu0 0.0
    %672 = vmatpush1.msra.mxu0 0.0
    %673 = vmatprep.subr.mxu0 0.0
    %674 = vmatpush1.msra.mxu0 0.0
    %675 = vmatprep.mubr.f32.mxu0 0.0
    %676 = vmatmul.mubr.f32.gmra.mrb[0].mxu0 %v609
    %v677 = vpop.f32.mrb[0].mxu0
    %v678 = vadd.f32 0.0, %v677
    %v679 = vpop.f32.mrb[0].mxu0
    %680 = vdwg.mxu0
    %v681 = vadd.f32 %v608, %v678
    %v682 = vxor.u32 %v681, 2147483648
    %v683 = vmul.f32 %v682, 1.442695
    %v684 = vpow.pop %v683
    %v685 = vadd.f32 %v684, 1.0
    %v686 = vrcp.pop %v685
    %v687 = vmul.f32 1.0, %v686
    %v688 = vtanh.pop %v681
    %v689 = vmul.f32 %v687, %v589
    %691 = vrot.lane.b32.xlu0 %v688, 32
    %v692 = vpop.permute.xlu0 %691
    %v694 = vmul.f32 %v687, %v692
    %696 = vrot.lane.b32.xlu0 %v694, 32
    %v697 = vpop.permute.xlu0 %696
    %v699 = vadd.f32 %v689, %v697
    %v700 = vtanh.pop %v699
    %702 = vrot.lane.b32.xlu0 %v700, 32
    %v703 = vpop.permute.xlu0 %702
    %v705 = vmul.f32 %v687, %v703
    %707 = vrot.lane.b32.xlu0 %v705, 64
    %v708 = vpop.permute.xlu0 %707
    %s710 = scalar_lea.vmem [#allocation3], 24
    %711 = vst.msk [vmem:[%s710] sm:$0xff] %vm380, %v708
    %712 = vrot.lane.b32.xlu0 %v705, 48
    %v713 = vpop.permute.xlu0 %712
    %s715 = scalar_lea.vmem [#allocation4], 32
    %716 = vst.msk [vmem:[%s715] sm:$0xff] %vm380, %v713
    %s717 = scalar_lea.vmem [#allocation2], 32
    %v718 = vld [vmem:[%s717] sm:$0xff]
    %v719 = vsel %vm273, %v708, 0
    %721 = vmatprep.subr.mxu0 0.0
    %722 = vmatpush1.msra.mxu0 %v257
    %723 = vmatprep.subr.mxu0 0.0
    %724 = vmatpush1.msra.mxu0 %v258
    %725 = vmatprep.subr.mxu0 0.0
    %726 = vmatpush1.msra.mxu0 %v259
    %727 = vmatprep.subr.mxu0 0.0
    %728 = vmatpush1.msra.mxu0 %v260
    %729 = vmatprep.subr.mxu0 0.0
    %730 = vmatpush1.msra.mxu0 0.0
    %731 = vmatprep.subr.mxu0 0.0
    %732 = vmatpush1.msra.mxu0 0.0
    %733 = vmatprep.subr.mxu0 0.0
    %734 = vmatpush1.msra.mxu0 0.0
    %735 = vmatprep.subr.mxu0 0.0
    %736 = vmatpush1.msra.mxu0 0.0
    %737 = vmatprep.subr.mxu0 0.0
    %738 = vmatpush1.msra.mxu0 0.0
    %739 = vmatprep.subr.mxu0 0.0
    %740 = vmatpush1.msra.mxu0 0.0
    %741 = vmatprep.subr.mxu0 0.0
    %742 = vmatpush1.msra.mxu0 0.0
    %743 = vmatprep.subr.mxu0 0.0
    %744 = vmatpush1.msra.mxu0 0.0
    %745 = vmatprep.subr.mxu0 0.0
    %746 = vmatpush1.msra.mxu0 0.0
    %747 = vmatprep.subr.mxu0 0.0
    %748 = vmatpush1.msra.mxu0 0.0
    %749 = vmatprep.subr.mxu0 0.0
    %750 = vmatpush1.msra.mxu0 0.0
    %751 = vmatprep.subr.mxu0 0.0
    %752 = vmatpush1.msra.mxu0 0.0
    %753 = vmatprep.subr.mxu0 0.0
    %754 = vmatpush1.msra.mxu0 0.0
    %755 = vmatprep.subr.mxu0 0.0
    %756 = vmatpush1.msra.mxu0 0.0
    %757 = vmatprep.subr.mxu0 0.0
    %758 = vmatpush1.msra.mxu0 0.0
    %759 = vmatprep.subr.mxu0 0.0
    %760 = vmatpush1.msra.mxu0 0.0
    %761 = vmatprep.subr.mxu0 0.0
    %762 = vmatpush1.msra.mxu0 0.0
    %763 = vmatprep.subr.mxu0 0.0
    %764 = vmatpush1.msra.mxu0 0.0
    %765 = vmatprep.subr.mxu0 0.0
    %766 = vmatpush1.msra.mxu0 0.0
    %767 = vmatprep.subr.mxu0 0.0
    %768 = vmatpush1.msra.mxu0 0.0
    %769 = vmatprep.subr.mxu0 0.0
    %770 = vmatpush1.msra.mxu0 0.0
    %771 = vmatprep.subr.mxu0 0.0
    %772 = vmatpush1.msra.mxu0 0.0
    %773 = vmatprep.subr.mxu0 0.0
    %774 = vmatpush1.msra.mxu0 0.0
    %775 = vmatprep.subr.mxu0 0.0
    %776 = vmatpush1.msra.mxu0 0.0
    %777 = vmatprep.subr.mxu0 0.0
    %778 = vmatpush1.msra.mxu0 0.0
    %779 = vmatprep.subr.mxu0 0.0
    %780 = vmatpush1.msra.mxu0 0.0
    %781 = vmatprep.subr.mxu0 0.0
    %782 = vmatpush1.msra.mxu0 0.0
    %783 = vmatprep.subr.mxu0 0.0
    %784 = vmatpush1.msra.mxu0 0.0
    %785 = vmatprep.mubr.f32.mxu0 0.0
    %786 = vmatmul.mubr.f32.gmra.mrb[0].mxu0 %v719
    %v787 = vpop.f32.mrb[0].mxu0
    %v788 = vadd.f32 0.0, %v787
    %v789 = vpop.f32.mrb[0].mxu0
    %790 = vdwg.mxu0
    %v791 = vadd.f32 %v718, %v788
    %v792 = vxor.u32 %v791, 2147483648
    %v793 = vmul.f32 %v792, 1.442695
    %v794 = vpow.pop %v793
    %v795 = vadd.f32 %v794, 1.0
    %v796 = vrcp.pop %v795
    %v797 = vmul.f32 1.0, %v796
    %v798 = vtanh.pop %v791
    %v799 = vmul.f32 %v797, %v699
    %801 = vrot.lane.b32.xlu0 %v798, 32
    %v802 = vpop.permute.xlu0 %801
    %v804 = vmul.f32 %v797, %v802
    %806 = vrot.lane.b32.xlu0 %v804, 32
    %v807 = vpop.permute.xlu0 %806
    %v809 = vadd.f32 %v799, %v807
    %v810 = vtanh.pop %v809
    %812 = vrot.lane.b32.xlu0 %v810, 32
    %v813 = vpop.permute.xlu0 %812
    %v815 = vmul.f32 %v797, %v813
    %817 = vrot.lane.b32.xlu0 %v815, 64
    %v818 = vpop.permute.xlu0 %817
    %s820 = scalar_lea.vmem [#allocation3], 32
    %821 = vst.msk [vmem:[%s820] sm:$0xff] %vm380, %v818
    %822 = vrot.lane.b32.xlu0 %v815, 48
    %v823 = vpop.permute.xlu0 %822
    %s825 = scalar_lea.vmem [#allocation4], 24
    %826 = vst.msk [vmem:[%s825] sm:$0xff] %vm380, %v823
    %s827 = scalar_lea.vmem [#allocation2], 40
    %v828 = vld [vmem:[%s827] sm:$0xff]
    %v829 = vsel %vm273, %v818, 0
    %831 = vmatprep.subr.mxu0 0.0
    %832 = vmatpush1.msra.mxu0 %v257
    %833 = vmatprep.subr.mxu0 0.0
    %834 = vmatpush1.msra.mxu0 %v258
    %835 = vmatprep.subr.mxu0 0.0
    %836 = vmatpush1.msra.mxu0 %v259
    %837 = vmatprep.subr.mxu0 0.0
    %838 = vmatpush1.msra.mxu0 %v260
    %839 = vmatprep.subr.mxu0 0.0
    %840 = vmatpush1.msra.mxu0 0.0
    %841 = vmatprep.subr.mxu0 0.0
    %842 = vmatpush1.msra.mxu0 0.0
    %843 = vmatprep.subr.mxu0 0.0
    %844 = vmatpush1.msra.mxu0 0.0
    %845 = vmatprep.subr.mxu0 0.0
    %846 = vmatpush1.msra.mxu0 0.0
    %847 = vmatprep.subr.mxu0 0.0
    %848 = vmatpush1.msra.mxu0 0.0
    %849 = vmatprep.subr.mxu0 0.0
    %850 = vmatpush1.msra.mxu0 0.0
    %851 = vmatprep.subr.mxu0 0.0
    %852 = vmatpush1.msra.mxu0 0.0
    %853 = vmatprep.subr.mxu0 0.0
    %854 = vmatpush1.msra.mxu0 0.0
    %855 = vmatprep.subr.mxu0 0.0
    %856 = vmatpush1.msra.mxu0 0.0
    %857 = vmatprep.subr.mxu0 0.0
    %858 = vmatpush1.msra.mxu0 0.0
    %859 = vmatprep.subr.mxu0 0.0
    %860 = vmatpush1.msra.mxu0 0.0
    %861 = vmatprep.subr.mxu0 0.0
    %862 = vmatpush1.msra.mxu0 0.0
    %863 = vmatprep.subr.mxu0 0.0
    %864 = vmatpush1.msra.mxu0 0.0
    %865 = vmatprep.subr.mxu0 0.0
    %866 = vmatpush1.msra.mxu0 0.0
    %867 = vmatprep.subr.mxu0 0.0
    %868 = vmatpush1.msra.mxu0 0.0
    %869 = vmatprep.subr.mxu0 0.0
    %870 = vmatpush1.msra.mxu0 0.0
    %871 = vmatprep.subr.mxu0 0.0
    %872 = vmatpush1.msra.mxu0 0.0
    %873 = vmatprep.subr.mxu0 0.0
    %874 = vmatpush1.msra.mxu0 0.0
    %875 = vmatprep.subr.mxu0 0.0
    %876 = vmatpush1.msra.mxu0 0.0
    %877 = vmatprep.subr.mxu0 0.0
    %878 = vmatpush1.msra.mxu0 0.0
    %879 = vmatprep.subr.mxu0 0.0
    %880 = vmatpush1.msra.mxu0 0.0
    %881 = vmatprep.subr.mxu0 0.0
    %882 = vmatpush1.msra.mxu0 0.0
    %883 = vmatprep.subr.mxu0 0.0
    %884 = vmatpush1.msra.mxu0 0.0
    %885 = vmatprep.subr.mxu0 0.0
    %886 = vmatpush1.msra.mxu0 0.0
    %887 = vmatprep.subr.mxu0 0.0
    %888 = vmatpush1.msra.mxu0 0.0
    %889 = vmatprep.subr.mxu0 0.0
    %890 = vmatpush1.msra.mxu0 0.0
    %891 = vmatprep.subr.mxu0 0.0
    %892 = vmatpush1.msra.mxu0 0.0
    %893 = vmatprep.subr.mxu0 0.0
    %894 = vmatpush1.msra.mxu0 0.0
    %895 = vmatprep.mubr.f32.mxu0 0.0
    %896 = vmatmul.mubr.f32.gmra.mrb[0].mxu0 %v829
    %v897 = vpop.f32.mrb[0].mxu0
    %v898 = vadd.f32 0.0, %v897
    %v899 = vpop.f32.mrb[0].mxu0
    %900 = vdwg.mxu0
    %v901 = vadd.f32 %v828, %v898
    %v902 = vxor.u32 %v901, 2147483648
    %v903 = vmul.f32 %v902, 1.442695
    %v904 = vpow.pop %v903
    %v905 = vadd.f32 %v904, 1.0
    %v906 = vrcp.pop %v905
    %v907 = vmul.f32 1.0, %v906
    %v908 = vtanh.pop %v901
    %v909 = vmul.f32 %v907, %v809
    %911 = vrot.lane.b32.xlu0 %v908, 32
    %v912 = vpop.permute.xlu0 %911
    %v914 = vmul.f32 %v907, %v912
    %916 = vrot.lane.b32.xlu0 %v914, 32
    %v917 = vpop.permute.xlu0 %916
    %v919 = vadd.f32 %v909, %v917
    %v920 = vtanh.pop %v919
    %922 = vrot.lane.b32.xlu0 %v920, 32
    %v923 = vpop.permute.xlu0 %922
    %v925 = vmul.f32 %v907, %v923
    %927 = vrot.lane.b32.xlu0 %v925, 64
    %v928 = vpop.permute.xlu0 %927
    %s930 = scalar_lea.vmem [#allocation3], 40
    %931 = vst.msk [vmem:[%s930] sm:$0xff] %vm380, %v928
    %932 = vrot.lane.b32.xlu0 %v925, 48
    %v933 = vpop.permute.xlu0 %932
    %s935 = scalar_lea.vmem [#allocation4], 16
    %936 = vst.msk [vmem:[%s935] sm:$0xff] %vm380, %v933
    %s937 = scalar_lea.vmem [#allocation2], 48
    %v938 = vld [vmem:[%s937] sm:$0xff]
    %v939 = vsel %vm273, %v928, 0
    %941 = vmatprep.subr.mxu0 0.0
    %942 = vmatpush1.msra.mxu0 %v257
    %943 = vmatprep.subr.mxu0 0.0
    %944 = vmatpush1.msra.mxu0 %v258
    %945 = vmatprep.subr.mxu0 0.0
    %946 = vmatpush1.msra.mxu0 %v259
    %947 = vmatprep.subr.mxu0 0.0
    %948 = vmatpush1.msra.mxu0 %v260
    %949 = vmatprep.subr.mxu0 0.0
    %950 = vmatpush1.msra.mxu0 0.0
    %951 = vmatprep.subr.mxu0 0.0
    %952 = vmatpush1.msra.mxu0 0.0
    %953 = vmatprep.subr.mxu0 0.0
    %954 = vmatpush1.msra.mxu0 0.0
    %955 = vmatprep.subr.mxu0 0.0
    %956 = vmatpush1.msra.mxu0 0.0
    %957 = vmatprep.subr.mxu0 0.0
    %958 = vmatpush1.msra.mxu0 0.0
    %959 = vmatprep.subr.mxu0 0.0
    %960 = vmatpush1.msra.mxu0 0.0
    %961 = vmatprep.subr.mxu0 0.0
    %962 = vmatpush1.msra.mxu0 0.0
    %963 = vmatprep.subr.mxu0 0.0
    %964 = vmatpush1.msra.mxu0 0.0
    %965 = vmatprep.subr.mxu0 0.0
    %966 = vmatpush1.msra.mxu0 0.0
    %967 = vmatprep.subr.mxu0 0.0
    %968 = vmatpush1.msra.mxu0 0.0
    %969 = vmatprep.subr.mxu0 0.0
    %970 = vmatpush1.msra.mxu0 0.0
    %971 = vmatprep.subr.mxu0 0.0
    %972 = vmatpush1.msra.mxu0 0.0
    %973 = vmatprep.subr.mxu0 0.0
    %974 = vmatpush1.msra.mxu0 0.0
    %975 = vmatprep.subr.mxu0 0.0
    %976 = vmatpush1.msra.mxu0 0.0
    %977 = vmatprep.subr.mxu0 0.0
    %978 = vmatpush1.msra.mxu0 0.0
    %979 = vmatprep.subr.mxu0 0.0
    %980 = vmatpush1.msra.mxu0 0.0
    %981 = vmatprep.subr.mxu0 0.0
    %982 = vmatpush1.msra.mxu0 0.0
    %983 = vmatprep.subr.mxu0 0.0
    %984 = vmatpush1.msra.mxu0 0.0
    %985 = vmatprep.subr.mxu0 0.0
    %986 = vmatpush1.msra.mxu0 0.0
    %987 = vmatprep.subr.mxu0 0.0
    %988 = vmatpush1.msra.mxu0 0.0
    %989 = vmatprep.subr.mxu0 0.0
    %990 = vmatpush1.msra.mxu0 0.0
    %991 = vmatprep.subr.mxu0 0.0
    %992 = vmatpush1.msra.mxu0 0.0
    %993 = vmatprep.subr.mxu0 0.0
    %994 = vmatpush1.msra.mxu0 0.0
    %995 = vmatprep.subr.mxu0 0.0
    %996 = vmatpush1.msra.mxu0 0.0
    %997 = vmatprep.subr.mxu0 0.0
    %998 = vmatpush1.msra.mxu0 0.0
    %999 = vmatprep.subr.mxu0 0.0
    %1000 = vmatpush1.msra.mxu0 0.0
    %1001 = vmatprep.subr.mxu0 0.0
    %1002 = vmatpush1.msra.mxu0 0.0
    %1003 = vmatprep.subr.mxu0 0.0
    %1004 = vmatpush1.msra.mxu0 0.0
    %1005 = vmatprep.mubr.f32.mxu0 0.0
    %1006 = vmatmul.mubr.f32.gmra.mrb[0].mxu0 %v939
    %v1007 = vpop.f32.mrb[0].mxu0
    %v1008 = vadd.f32 0.0, %v1007
    %v1009 = vpop.f32.mrb[0].mxu0
    %1010 = vdwg.mxu0
    %v1011 = vadd.f32 %v938, %v1008
    %v1012 = vxor.u32 %v1011, 2147483648
    %v1013 = vmul.f32 %v1012, 1.442695
    %v1014 = vpow.pop %v1013
    %v1015 = vadd.f32 %v1014, 1.0
    %v1016 = vrcp.pop %v1015
    %v1017 = vmul.f32 1.0, %v1016
    %v1018 = vtanh.pop %v1011
    %v1019 = vmul.f32 %v1017, %v919
    %1021 = vrot.lane.b32.xlu0 %v1018, 32
    %v1022 = vpop.permute.xlu0 %1021
    %v1024 = vmul.f32 %v1017, %v1022
    %1026 = vrot.lane.b32.xlu0 %v1024, 32
    %v1027 = vpop.permute.xlu0 %1026
    %v1029 = vadd.f32 %v1019, %v1027
    %v1030 = vtanh.pop %v1029
    %1032 = vrot.lane.b32.xlu0 %v1030, 32
    %v1033 = vpop.permute.xlu0 %1032
    %v1035 = vmul.f32 %v1017, %v1033
    %1037 = vrot.lane.b32.xlu0 %v1035, 64
    %v1038 = vpop.permute.xlu0 %1037
    %s1040 = scalar_lea.vmem [#allocation3], 48
    %1041 = vst.msk [vmem:[%s1040] sm:$0xff] %vm380, %v1038
    %1042 = vrot.lane.b32.xlu0 %v1035, 48
    %v1043 = vpop.permute.xlu0 %1042
    %s1045 = scalar_lea.vmem [#allocation4], 8
    %1046 = vst.msk [vmem:[%s1045] sm:$0xff] %vm380, %v1043
    %s1047 = scalar_lea.vmem [#allocation2], 56
    %v1048 = vld [vmem:[%s1047] sm:$0xff]
    %v1049 = vsel %vm273, %v1038, 0
    %1051 = vmatprep.subr.mxu0 0.0
    %1052 = vmatpush1.msra.mxu0 %v257
    %1053 = vmatprep.subr.mxu0 0.0
    %1054 = vmatpush1.msra.mxu0 %v258
    %1055 = vmatprep.subr.mxu0 0.0
    %1056 = vmatpush1.msra.mxu0 %v259
    %1057 = vmatprep.subr.mxu0 0.0
    %1058 = vmatpush1.msra.mxu0 %v260
    %1059 = vmatprep.subr.mxu0 0.0
    %1060 = vmatpush1.msra.mxu0 0.0
    %1061 = vmatprep.subr.mxu0 0.0
    %1062 = vmatpush1.msra.mxu0 0.0
    %1063 = vmatprep.subr.mxu0 0.0
    %1064 = vmatpush1.msra.mxu0 0.0
    %1065 = vmatprep.subr.mxu0 0.0
    %1066 = vmatpush1.msra.mxu0 0.0
    %1067 = vmatprep.subr.mxu0 0.0
    %1068 = vmatpush1.msra.mxu0 0.0
    %1069 = vmatprep.subr.mxu0 0.0
    %1070 = vmatpush1.msra.mxu0 0.0
    %1071 = vmatprep.subr.mxu0 0.0
    %1072 = vmatpush1.msra.mxu0 0.0
    %1073 = vmatprep.subr.mxu0 0.0
    %1074 = vmatpush1.msra.mxu0 0.0
    %1075 = vmatprep.subr.mxu0 0.0
    %1076 = vmatpush1.msra.mxu0 0.0
    %1077 = vmatprep.subr.mxu0 0.0
    %1078 = vmatpush1.msra.mxu0 0.0
    %1079 = vmatprep.subr.mxu0 0.0
    %1080 = vmatpush1.msra.mxu0 0.0
    %1081 = vmatprep.subr.mxu0 0.0
    %1082 = vmatpush1.msra.mxu0 0.0
    %1083 = vmatprep.subr.mxu0 0.0
    %1084 = vmatpush1.msra.mxu0 0.0
    %1085 = vmatprep.subr.mxu0 0.0
    %1086 = vmatpush1.msra.mxu0 0.0
    %1087 = vmatprep.subr.mxu0 0.0
    %1088 = vmatpush1.msra.mxu0 0.0
    %1089 = vmatprep.subr.mxu0 0.0
    %1090 = vmatpush1.msra.mxu0 0.0
    %1091 = vmatprep.subr.mxu0 0.0
    %1092 = vmatpush1.msra.mxu0 0.0
    %1093 = vmatprep.subr.mxu0 0.0
    %1094 = vmatpush1.msra.mxu0 0.0
    %1095 = vmatprep.subr.mxu0 0.0
    %1096 = vmatpush1.msra.mxu0 0.0
    %1097 = vmatprep.subr.mxu0 0.0
    %1098 = vmatpush1.msra.mxu0 0.0
    %1099 = vmatprep.subr.mxu0 0.0
    %1100 = vmatpush1.msra.mxu0 0.0
    %1101 = vmatprep.subr.mxu0 0.0
    %1102 = vmatpush1.msra.mxu0 0.0
    %1103 = vmatprep.subr.mxu0 0.0
    %1104 = vmatpush1.msra.mxu0 0.0
    %1105 = vmatprep.subr.mxu0 0.0
    %1106 = vmatpush1.msra.mxu0 0.0
    %1107 = vmatprep.subr.mxu0 0.0
    %1108 = vmatpush1.msra.mxu0 0.0
    %1109 = vmatprep.subr.mxu0 0.0
    %1110 = vmatpush1.msra.mxu0 0.0
    %1111 = vmatprep.subr.mxu0 0.0
    %1112 = vmatpush1.msra.mxu0 0.0
    %1113 = vmatprep.subr.mxu0 0.0
    %1114 = vmatpush1.msra.mxu0 0.0
    %1115 = vmatprep.mubr.f32.mxu0 0.0
    %1116 = vmatmul.mubr.f32.gmra.mrb[0].mxu0 %v1049
    %v1117 = vpop.f32.mrb[0].mxu0
    %v1118 = vadd.f32 0.0, %v1117
    %v1119 = vpop.f32.mrb[0].mxu0
    %1120 = vdwg.mxu0
    %v1121 = vadd.f32 %v1048, %v1118
    %v1122 = vxor.u32 %v1121, 2147483648
    %v1123 = vmul.f32 %v1122, 1.442695
    %v1124 = vpow.pop %v1123
    %v1125 = vadd.f32 %v1124, 1.0
    %v1126 = vrcp.pop %v1125
    %v1127 = vmul.f32 1.0, %v1126
    %v1128 = vtanh.pop %v1121
    %v1129 = vmul.f32 %v1127, %v1029
    %1131 = vrot.lane.b32.xlu0 %v1128, 32
    %v1132 = vpop.permute.xlu0 %1131
    %v1134 = vmul.f32 %v1127, %v1132
    %1136 = vrot.lane.b32.xlu0 %v1134, 32
    %v1137 = vpop.permute.xlu0 %1136
    %v1139 = vadd.f32 %v1129, %v1137
    %v1140 = vtanh.pop %v1139
    %1142 = vrot.lane.b32.xlu0 %v1140, 32
    %v1143 = vpop.permute.xlu0 %1142
    %v1145 = vmul.f32 %v1127, %v1143
    %1147 = vrot.lane.b32.xlu0 %v1145, 64
    %v1148 = vpop.permute.xlu0 %1147
    %s1150 = scalar_lea.vmem [#allocation3], 56
    %1151 = vst.msk [vmem:[%s1150] sm:$0xff] %vm380, %v1148
    %1152 = vrot.lane.b32.xlu0 %v1145, 48
    %v1153 = vpop.permute.xlu0 %1152
    %1155 = vst.msk [vmem:[#allocation4] sm:$0xff] %vm380, %v1153
    %v1156 = vld [vmem:[#allocation3] sm:$0xff]
    %v1157 = vld [vmem:[#allocation3 + $0x8] sm:$0xff]
    %v1158 = vld [vmem:[#allocation3 + $0x10] sm:$0xff]
    %v1159 = vld [vmem:[#allocation3 + $0x18] sm:$0xff]
    %v1160 = vld [vmem:[#allocation3 + $0x20] sm:$0xff]
    %v1161 = vld [vmem:[#allocation3 + $0x28] sm:$0xff]
    %v1162 = vld [vmem:[#allocation3 + $0x30] sm:$0xff]
    %v1163 = vld [vmem:[#allocation3 + $0x38] sm:$0xff]
    %v1164 = vld [vmem:[%s5] sm:$0xff]
    %v1165 = vld [vmem:[%s5 + $0x8] sm:$0xff]
    %v1166 = vld [vmem:[#allocation4] sm:$0xff]
    %v1167 = vld [vmem:[#allocation4 + $0x8] sm:$0xff]
    %v1168 = vld [vmem:[#allocation4 + $0x10] sm:$0xff]
    %v1169 = vld [vmem:[#allocation4 + $0x18] sm:$0xff]
    %v1170 = vld [vmem:[#allocation4 + $0x20] sm:$0xff]
    %v1171 = vld [vmem:[#allocation4 + $0x28] sm:$0xff]
    %v1172 = vld [vmem:[#allocation4 + $0x30] sm:$0xff]
    %v1173 = vld [vmem:[#allocation4 + $0x38] sm:$0xff]
    %v1174 = vld [vmem:[#allocation13] sm:$0xff]
    %v1175 = vld [vmem:[#allocation13 + $0x8] sm:$0xff]
    %v1177 = vsel %vm380, %v1166, 0
    %v1180 = vsel %vm380, %v1167, 0
    %v1183 = vsel %vm380, %v1168, 0
    %v1186 = vsel %vm380, %v1169, 0
    %v1189 = vsel %vm380, %v1170, 0
    %v1192 = vsel %vm380, %v1171, 0
    %v1195 = vsel %vm380, %v1172, 0
    %v1198 = vsel %vm380, %v1173, 0
    %1200 = vmatprep.subr.mxu0 0.0
    %1201 = vmatpush1.msra.mxu0 %v1174
    %1202 = vmatprep.subr.mxu0 0.0
    %1203 = vmatpush1.msra.mxu0 %v1175
    %1204 = vmatprep.subr.mxu0 0.0
    %1205 = vmatpush1.msra.mxu0 0.0
    %1206 = vmatprep.subr.mxu0 0.0
    %1207 = vmatpush1.msra.mxu0 0.0
    %1208 = vmatprep.subr.mxu0 0.0
    %1209 = vmatpush1.msra.mxu0 0.0
    %1210 = vmatprep.subr.mxu0 0.0
    %1211 = vmatpush1.msra.mxu0 0.0
    %1212 = vmatprep.subr.mxu0 0.0
    %1213 = vmatpush1.msra.mxu0 0.0
    %1214 = vmatprep.subr.mxu0 0.0
    %1215 = vmatpush1.msra.mxu0 0.0
    %1216 = vmatprep.subr.mxu0 0.0
    %1217 = vmatpush1.msra.mxu0 0.0
    %1218 = vmatprep.subr.mxu0 0.0
    %1219 = vmatpush1.msra.mxu0 0.0
    %1220 = vmatprep.subr.mxu0 0.0
    %1221 = vmatpush1.msra.mxu0 0.0
    %1222 = vmatprep.subr.mxu0 0.0
    %1223 = vmatpush1.msra.mxu0 0.0
    %1224 = vmatprep.subr.mxu0 0.0
    %1225 = vmatpush1.msra.mxu0 0.0
    %1226 = vmatprep.subr.mxu0 0.0
    %1227 = vmatpush1.msra.mxu0 0.0
    %1228 = vmatprep.subr.mxu0 0.0
    %1229 = vmatpush1.msra.mxu0 0.0
    %1230 = vmatprep.subr.mxu0 0.0
    %1231 = vmatpush1.msra.mxu0 0.0
    %1232 = vmatprep.subr.mxu0 0.0
    %1233 = vmatpush1.msra.mxu0 0.0
    %1234 = vmatprep.subr.mxu0 0.0
    %1235 = vmatpush1.msra.mxu0 0.0
    %1236 = vmatprep.subr.mxu0 0.0
    %1237 = vmatpush1.msra.mxu0 0.0
    %1238 = vmatprep.subr.mxu0 0.0
    %1239 = vmatpush1.msra.mxu0 0.0
    %1240 = vmatprep.subr.mxu0 0.0
    %1241 = vmatpush1.msra.mxu0 0.0
    %1242 = vmatprep.subr.mxu0 0.0
    %1243 = vmatpush1.msra.mxu0 0.0
    %1244 = vmatprep.subr.mxu0 0.0
    %1245 = vmatpush1.msra.mxu0 0.0
    %1246 = vmatprep.subr.mxu0 0.0
    %1247 = vmatpush1.msra.mxu0 0.0
    %1248 = vmatprep.subr.mxu0 0.0
    %1249 = vmatpush1.msra.mxu0 0.0
    %1250 = vmatprep.subr.mxu0 0.0
    %1251 = vmatpush1.msra.mxu0 0.0
    %1252 = vmatprep.subr.mxu0 0.0
    %1253 = vmatpush1.msra.mxu0 0.0
    %1254 = vmatprep.subr.mxu0 0.0
    %1255 = vmatpush1.msra.mxu0 0.0
    %1256 = vmatprep.subr.mxu0 0.0
    %1257 = vmatpush1.msra.mxu0 0.0
    %1258 = vmatprep.subr.mxu0 0.0
    %1259 = vmatpush1.msra.mxu0 0.0
    %1260 = vmatprep.subr.mxu0 0.0
    %1261 = vmatpush1.msra.mxu0 0.0
    %1262 = vmatprep.subr.mxu0 0.0
    %1263 = vmatpush1.msra.mxu0 0.0
    %1264 = vmatprep.mubr.f32.mxu0 0.0
    %1265 = vmatmul.mubr.f32.gmra.mrb[0].mxu0 %v1177
    %v1266 = vpop.f32.mrb[0].mxu0
    %v1267 = vadd.f32 0.0, %v1266
    %v1268 = vpop.f32.mrb[0].mxu0
    %1269 = vmatprep.mubr.f32.mxu0 0.0
    %1270 = vmatmul.mubr.f32.gmra.mrb[0].mxu0 %v1180
    %v1271 = vpop.f32.mrb[0].mxu0
    %v1272 = vadd.f32 0.0, %v1271
    %v1273 = vpop.f32.mrb[0].mxu0
    %1274 = vmatprep.mubr.f32.mxu0 0.0
    %1275 = vmatmul.mubr.f32.gmra.mrb[0].mxu0 %v1183
    %v1276 = vpop.f32.mrb[0].mxu0
    %v1277 = vadd.f32 0.0, %v1276
    %v1278 = vpop.f32.mrb[0].mxu0
    %1279 = vmatprep.mubr.f32.mxu0 0.0
    %1280 = vmatmul.mubr.f32.gmra.mrb[0].mxu0 %v1186
    %v1281 = vpop.f32.mrb[0].mxu0
    %v1282 = vadd.f32 0.0, %v1281
    %v1283 = vpop.f32.mrb[0].mxu0
    %1284 = vmatprep.mubr.f32.mxu0 0.0
    %1285 = vmatmul.mubr.f32.gmra.mrb[0].mxu0 %v1189
    %v1286 = vpop.f32.mrb[0].mxu0
    %v1287 = vadd.f32 0.0, %v1286
    %v1288 = vpop.f32.mrb[0].mxu0
    %1289 = vmatprep.mubr.f32.mxu0 0.0
    %1290 = vmatmul.mubr.f32.gmra.mrb[0].mxu0 %v1192
    %v1291 = vpop.f32.mrb[0].mxu0
    %v1292 = vadd.f32 0.0, %v1291
    %v1293 = vpop.f32.mrb[0].mxu0
    %1294 = vmatprep.mubr.f32.mxu0 0.0
    %1295 = vmatmul.mubr.f32.gmra.mrb[0].mxu0 %v1195
    %v1296 = vpop.f32.mrb[0].mxu0
    %v1297 = vadd.f32 0.0, %v1296
    %v1298 = vpop.f32.mrb[0].mxu0
    %1299 = vmatprep.mubr.f32.mxu0 0.0
    %1300 = vmatmul.mubr.f32.gmra.mrb[0].mxu0 %v1198
    %v1301 = vpop.f32.mrb[0].mxu0
    %v1302 = vadd.f32 0.0, %v1301
    %v1303 = vpop.f32.mrb[0].mxu0
    %1304 = vdwg.mxu0
    %v1306 = vsel %vm380, %v1156, 0
    %v1309 = vsel %vm380, %v1157, 0
    %v1312 = vsel %vm380, %v1158, 0
    %v1315 = vsel %vm380, %v1159, 0
    %v1318 = vsel %vm380, %v1160, 0
    %v1321 = vsel %vm380, %v1161, 0
    %v1324 = vsel %vm380, %v1162, 0
    %v1327 = vsel %vm380, %v1163, 0
    %1329 = vmatprep.subr.mxu0 0.0
    %1330 = vmatpush1.msra.mxu0 %v1164
    %1331 = vmatprep.subr.mxu0 0.0
    %1332 = vmatpush1.msra.mxu0 %v1165
    %1333 = vmatprep.subr.mxu0 0.0
    %1334 = vmatpush1.msra.mxu0 0.0
    %1335 = vmatprep.subr.mxu0 0.0
    %1336 = vmatpush1.msra.mxu0 0.0
    %1337 = vmatprep.subr.mxu0 0.0
    %1338 = vmatpush1.msra.mxu0 0.0
    %1339 = vmatprep.subr.mxu0 0.0
    %1340 = vmatpush1.msra.mxu0 0.0
    %1341 = vmatprep.subr.mxu0 0.0
    %1342 = vmatpush1.msra.mxu0 0.0
    %1343 = vmatprep.subr.mxu0 0.0
    %1344 = vmatpush1.msra.mxu0 0.0
    %1345 = vmatprep.subr.mxu0 0.0
    %1346 = vmatpush1.msra.mxu0 0.0
    %1347 = vmatprep.subr.mxu0 0.0
    %1348 = vmatpush1.msra.mxu0 0.0
    %1349 = vmatprep.subr.mxu0 0.0
    %1350 = vmatpush1.msra.mxu0 0.0
    %1351 = vmatprep.subr.mxu0 0.0
    %1352 = vmatpush1.msra.mxu0 0.0
    %1353 = vmatprep.subr.mxu0 0.0
    %1354 = vmatpush1.msra.mxu0 0.0
    %1355 = vmatprep.subr.mxu0 0.0
    %1356 = vmatpush1.msra.mxu0 0.0
    %1357 = vmatprep.subr.mxu0 0.0
    %1358 = vmatpush1.msra.mxu0 0.0
    %1359 = vmatprep.subr.mxu0 0.0
    %1360 = vmatpush1.msra.mxu0 0.0
    %1361 = vmatprep.subr.mxu0 0.0
    %1362 = vmatpush1.msra.mxu0 0.0
    %1363 = vmatprep.subr.mxu0 0.0
    %1364 = vmatpush1.msra.mxu0 0.0
    %1365 = vmatprep.subr.mxu0 0.0
    %1366 = vmatpush1.msra.mxu0 0.0
    %1367 = vmatprep.subr.mxu0 0.0
    %1368 = vmatpush1.msra.mxu0 0.0
    %1369 = vmatprep.subr.mxu0 0.0
    %1370 = vmatpush1.msra.mxu0 0.0
    %1371 = vmatprep.subr.mxu0 0.0
    %1372 = vmatpush1.msra.mxu0 0.0
    %1373 = vmatprep.subr.mxu0 0.0
    %1374 = vmatpush1.msra.mxu0 0.0
    %1375 = vmatprep.subr.mxu0 0.0
    %1376 = vmatpush1.msra.mxu0 0.0
    %1377 = vmatprep.subr.mxu0 0.0
    %1378 = vmatpush1.msra.mxu0 0.0
    %1379 = vmatprep.subr.mxu0 0.0
    %1380 = vmatpush1.msra.mxu0 0.0
    %1381 = vmatprep.subr.mxu0 0.0
    %1382 = vmatpush1.msra.mxu0 0.0
    %1383 = vmatprep.subr.mxu0 0.0
    %1384 = vmatpush1.msra.mxu0 0.0
    %1385 = vmatprep.subr.mxu0 0.0
    %1386 = vmatpush1.msra.mxu0 0.0
    %1387 = vmatprep.subr.mxu0 0.0
    %1388 = vmatpush1.msra.mxu0 0.0
    %1389 = vmatprep.subr.mxu0 0.0
    %1390 = vmatpush1.msra.mxu0 0.0
    %1391 = vmatprep.subr.mxu0 0.0
    %1392 = vmatpush1.msra.mxu0 0.0
    %1393 = vmatprep.mubr.f32.mxu0 0.0
    %1394 = vmatmul.mubr.f32.gmra.mrb[0].mxu0 %v1306
    %v1395 = vpop.f32.mrb[0].mxu0
    %v1396 = vadd.f32 %v1267, %v1395
    %v1397 = vpop.f32.mrb[0].mxu0
    %1398 = vmatprep.mubr.f32.mxu0 0.0
    %1399 = vmatmul.mubr.f32.gmra.mrb[0].mxu0 %v1309
    %v1400 = vpop.f32.mrb[0].mxu0
    %v1401 = vadd.f32 %v1272, %v1400
    %v1402 = vpop.f32.mrb[0].mxu0
    %1403 = vmatprep.mubr.f32.mxu0 0.0
    %1404 = vmatmul.mubr.f32.gmra.mrb[0].mxu0 %v1312
    %v1405 = vpop.f32.mrb[0].mxu0
    %v1406 = vadd.f32 %v1277, %v1405
    %v1407 = vpop.f32.mrb[0].mxu0
    %1408 = vmatprep.mubr.f32.mxu0 0.0
    %1409 = vmatmul.mubr.f32.gmra.mrb[0].mxu0 %v1315
    %v1410 = vpop.f32.mrb[0].mxu0
    %v1411 = vadd.f32 %v1282, %v1410
    %v1412 = vpop.f32.mrb[0].mxu0
    %1413 = vmatprep.mubr.f32.mxu0 0.0
    %1414 = vmatmul.mubr.f32.gmra.mrb[0].mxu0 %v1318
    %v1415 = vpop.f32.mrb[0].mxu0
    %v1416 = vadd.f32 %v1287, %v1415
    %v1417 = vpop.f32.mrb[0].mxu0
    %1418 = vmatprep.mubr.f32.mxu0 0.0
    %1419 = vmatmul.mubr.f32.gmra.mrb[0].mxu0 %v1321
    %v1420 = vpop.f32.mrb[0].mxu0
    %v1421 = vadd.f32 %v1292, %v1420
    %v1422 = vpop.f32.mrb[0].mxu0
    %1423 = vmatprep.mubr.f32.mxu0 0.0
    %1424 = vmatmul.mubr.f32.gmra.mrb[0].mxu0 %v1324
    %v1425 = vpop.f32.mrb[0].mxu0
    %v1426 = vadd.f32 %v1297, %v1425
    %v1427 = vpop.f32.mrb[0].mxu0
    %1428 = vmatprep.mubr.f32.mxu0 0.0
    %1429 = vmatmul.mubr.f32.gmra.mrb[0].mxu0 %v1327
    %v1430 = vpop.f32.mrb[0].mxu0
    %v1431 = vadd.f32 %v1302, %v1430
    %v1432 = vpop.f32.mrb[0].mxu0
    %1433 = vdwg.mxu0
    %v1434 = vld [vmem:[%s7] sm:$0x1]
    %v1436 = vlaneseq
    %v1437 = vshrl.u32 %v1436, 7
    %v1438 = vsub.s32 0, %v1437
    %v1439 = vrot.slane %v1434, %v1438
    %v1441 = vadd.f32 %v1396, %v1439
    %v1442 = vadd.f32 %v1401, %v1439
    %v1443 = vadd.f32 %v1406, %v1439
    %v1444 = vadd.f32 %v1411, %v1439
    %v1445 = vadd.f32 %v1416, %v1439
    %v1446 = vadd.f32 %v1421, %v1439
    %v1447 = vadd.f32 %v1426, %v1439
    %v1448 = vadd.f32 %v1431, %v1439
    %1449 = vst [vmem:[#allocation14] sm:$0xff] %v1441
    %1450 = vst [vmem:[#allocation14 + $0x8] sm:$0xff] %v1442
    %1451 = vst [vmem:[#allocation14 + $0x10] sm:$0xff] %v1443
    %1452 = vst [vmem:[#allocation14 + $0x18] sm:$0xff] %v1444
    %1453 = vst [vmem:[#allocation14 + $0x20] sm:$0xff] %v1445
    %1454 = vst [vmem:[#allocation14 + $0x28] sm:$0xff] %v1446
    %1455 = vst [vmem:[#allocation14 + $0x30] sm:$0xff] %v1447
    %1456 = vst [vmem:[#allocation14 + $0x38] sm:$0xff] %v1448
    // Predicated region
    $region54: #{tpu_custom_call.1} parent=1 // pred_check
      _
    $region55: #{tpu_custom_call.1} parent=1 // pred_check_branch
      %1458 = sbr.rel (0) target = $region57
    $region56: #{tpu_custom_call.1} parent=1 // pred_region
      %s1460 = ssub.s32 1024, 1024
      %1461 = vsyncadd [#allocation7], %s1460
      %s1462 = sshll.u32 [#allocation14], 4
      %s1463 = int_to_ptr.vmem [resolvable:$true] %s1462
      %1468 = dma.vmem_to_hbm [thread:$0]  %s1463, 1024, %s8, [#allocation7], 128, 128, 8
    $region57: #{tpu_custom_call.1} parent=1 // pred_fallthru
      _
    // Predicated region
    $region58: #{tpu_custom_call.1} parent=1 // pred_check
      _
    $region59: #{tpu_custom_call.1} parent=1 // pred_check_branch
      %1470 = sbr.rel (0) target = $region61
    $region60: #{tpu_custom_call.1} parent=1 // pred_region
      %1471 = dma.done [#allocation7], 1024
    $region61: #{tpu_custom_call.1} parent=1 // pred_fallthru
      _
    %1472 = vsyncpa [#allocation6], 1
    %1473 = vsyncpa [#allocation9], 1
    %1474 = vsyncpa [#allocation12], 1
    %1475 = vsyncpa [#allocation7], 1

</llo_original>
